<compile_context>
chip_gen: v6e
topology: v6e:2x2x1
jax: 0.10.0
libtpu: 0.0.40
codegen_flags: <defaults>
</compile_context>

<pallas_src>
import jax
import jax.numpy as jnp
from jax.experimental import pallas as pl
from jax.experimental.pallas import tpu as pltpu

_LANE = 128
_SUBLANE = 8


def _round_up(n, m):
    return ((n + m - 1) // m) * m


def _pad2(a, rows, cols):
    r, c = a.shape
    return jnp.pad(a, ((0, rows - r), (0, cols - c)))


# ---------------------------------------------------------------------------
# Kernel: whole 4-matmul + ReLU hot path for one batch tile.
# ---------------------------------------------------------------------------
def _encoder_kernel(
    x_ref,                  # (TB, Dp)  float32 (cast to bf16 in-kernel)
    w1_ref, b1_ref,         # (Dp,  H1p), (1, H1p)   w: bf16, b: f32
    w2_ref, b2_ref,         # (H1p, H2p), (1, H2p)
    w3_ref, b3_ref,         # (H2p, H3p), (1, H3p)
    wh_ref, bh_ref,         # (H3p, L2p), (1, L2p)   fused [mu | logvar] head
    out_ref,                # (TB, L2p)               fused [mu | logvar | pad]
):
    cdt = w1_ref.dtype  # MXU input dtype (bf16); accumulation stays f32.

    # In-kernel f32 -> bf16 cast: VPU work hidden under the MXU/DMA, and the
    # wrapper no longer runs a separate cast pass over x in HBM.
    x = x_ref[...].astype(cdt)

    h = jnp.dot(x, w1_ref[...], preferred_element_type=jnp.float32)
    h = jnp.maximum(h + b1_ref[...], 0.0).astype(cdt)

    h = jnp.dot(h, w2_ref[...], preferred_element_type=jnp.float32)
    h = jnp.maximum(h + b2_ref[...], 0.0).astype(cdt)

    h = jnp.dot(h, w3_ref[...], preferred_element_type=jnp.float32)
    h = jnp.maximum(h + b3_ref[...], 0.0).astype(cdt)

    out = jnp.dot(h, wh_ref[...], preferred_element_type=jnp.float32) + bh_ref[...]
    out_ref[...] = out.astype(out_ref.dtype)


# ---------------------------------------------------------------------------
# One-time parameter preparation (do NOT call per forward step).
# ---------------------------------------------------------------------------
def prepare_encoder_params(params, *, compute_dtype=jnp.bfloat16):
    """Torch-convention params -> kernel layout.

    - transpose W (out, in) -> (in, out)
    - fuse mu/logvar heads into a single (H3, 2L) weight / (2L,) bias
    - zero-pad every matmul K/N dim up to a multiple of 128 lanes
    - cast weights to `compute_dtype` (bf16 for the MXU); biases stay f32
    """
    w1, w2, w3 = params["w1"].T, params["w2"].T, params["w3"].T
    wh = jnp.concatenate([params["wmu"].T, params["wlv"].T], axis=1)
    b1, b2, b3 = params["b1"], params["b2"], params["b3"]
    bh = jnp.concatenate([params["bmu"], params["blv"]])

    D, H1 = w1.shape
    H2, H3, L2 = w2.shape[1], w3.shape[1], wh.shape[1]
    L = L2 // 2

    Dp = _round_up(D, _LANE)
    H1p = _round_up(H1, _LANE)
    H2p = _round_up(H2, _LANE)
    H3p = _round_up(H3, _LANE)
    L2p = _round_up(L2, _LANE)

    prep = dict(
        w1=_pad2(w1, Dp, H1p).astype(compute_dtype),
        w2=_pad2(w2, H1p, H2p).astype(compute_dtype),
        w3=_pad2(w3, H2p, H3p).astype(compute_dtype),
        wh=_pad2(wh, H3p, L2p).astype(compute_dtype),
        # Padded bias columns are zero, so ReLU(0 + 0) = 0 keeps padded lanes inert.
        b1=jnp.pad(b1, (0, H1p - H1)).astype(jnp.float32)[None, :],
        b2=jnp.pad(b2, (0, H2p - H2)).astype(jnp.float32)[None, :],
        b3=jnp.pad(b3, (0, H3p - H3)).astype(jnp.float32)[None, :],
        bh=jnp.pad(bh, (0, L2p - L2)).astype(jnp.float32)[None, :],
    )
    meta = dict(D=D, Dp=Dp, L=L, L2p=L2p, compute_dtype=compute_dtype)
    return prep, meta


def _vmem_capacity_bytes():
    """Per-core VMEM capacity; conservative fallback if the query is unavailable."""
    try:
        return int(pltpu.get_tpu_info().vmem_capacity_bytes)
    except Exception:
        return 64 << 20   # v7x per-TensorCore VMEM (smallest of v5e/v6e/v7x)


def _const_spec(shape):
    """Full-array, constant-index block. Single-buffered (DMA'd once, half the VMEM)."""
    try:
        return pl.BlockSpec(shape, lambda i: (0, 0),
                            pipeline_mode=pl.Buffered(buffer_count=1))
    except TypeError:  # older BlockSpec signature without pipeline_mode
        return pl.BlockSpec(shape, lambda i: (0, 0))


# ---------------------------------------------------------------------------
# Forward wrapper.
# ---------------------------------------------------------------------------
def encoder_forward(x, prep, meta, *, tile_b=1024, out_dtype=jnp.float32):
    """x: (B, input_dim) float32. prep/meta from prepare_encoder_params."""
    B, D = x.shape
    assert D == meta["D"], "feature dim mismatch with prepared params"
    Dp, L, L2p = meta["Dp"], meta["L"], meta["L2p"]

    w1, b1 = prep["w1"], prep["b1"]
    w2, b2 = prep["w2"], prep["b2"]
    w3, b3 = prep["w3"], prep["b3"]
    wh, bh = prep["wh"], prep["bh"]
    H1p, H2p, H3p = w1.shape[1], w2.shape[1], w3.shape[1]

    def nbytes(a):
        return int(a.size) * a.dtype.itemsize

    weight_bytes = sum(nbytes(a) for a in (w1, b1, w2, b2, w3, b3, wh, bh))
    x_isz = x.dtype.itemsize
    out_isz = jnp.dtype(out_dtype).itemsize

    vmem_cap = _vmem_capacity_bytes()
    headroom = 8 << 20

    # ---- batch tile selection -------------------------------------------------
    # 8-aligned, no larger than the (sublane-padded) batch; capped so the batch
    # grid has >= 2 steps (keeps both v7x TensorCores busy via "parallel" axis);
    # shrunk only if the single-buffered-weight footprint doesn't fit in VMEM.
    b8 = _round_up(B, _SUBLANE)
    tile_b = _round_up(min(tile_b, b8), _SUBLANE)
    if b8 >= 2 * _SUBLANE:
        tile_b = min(tile_b, _round_up(pl.cdiv(b8, 2), _SUBLANE))

    def footprint(tb):
        io = 2 * tb * (Dp * x_isz + L2p * out_isz)        # double-buffered x/out tiles
        act = tb * (H1p + H2p + H3p + L2p) * 4            # sequential f32 intermediates
        return weight_bytes + io + act                     # weights single-buffered

    while tile_b > _SUBLANE and footprint(tile_b) > vmem_cap - headroom:
        tile_b = _round_up(tile_b // 2, _SUBLANE)

    Bp = _round_up(B, tile_b)
    # Pad only when actually needed (x stays f32; the cast happens in-kernel).
    xp = x if (Bp == B and Dp == D) else jnp.pad(x, ((0, Bp - B), (0, Dp - D)))

    vmem_budget = int(min(max(footprint(tile_b) + headroom, 16 << 20), vmem_cap))
    grid = (Bp // tile_b,)

    out = pl.pallas_call(
        _encoder_kernel,
        out_shape=jax.ShapeDtypeStruct((Bp, L2p), out_dtype),
        grid_spec=pltpu.PrefetchScalarGridSpec(
            num_scalar_prefetch=0,
            grid=grid,
            in_specs=[
                pl.BlockSpec((tile_b, Dp), lambda i: (i, 0)),  # x batch tile
                _const_spec(w1.shape), _const_spec(b1.shape),
                _const_spec(w2.shape), _const_spec(b2.shape),
                _const_spec(w3.shape), _const_spec(b3.shape),
                _const_spec(wh.shape), _const_spec(bh.shape),
            ],
            out_specs=pl.BlockSpec((tile_b, L2p), lambda i: (i, 0)),
        ),
        compiler_params=pltpu.CompilerParams(
            dimension_semantics=("parallel",),   # batch axis -> both TCs on v7x
            vmem_limit_bytes=vmem_budget,
        ),
    )(xp, w1, b1, w2, b2, w3, b3, wh, bh)

    # One contiguous slice of the fused head, then split (avoids two separate
    # narrow 8-lane masked-store passes over the whole padded output).
    y = out[:B, :2 * L]
    mu = y[:, :L]
    logvar = y[:, L:]
    return mu, logvar


# ---------------------------------------------------------------------------
# Demo / self-test helpers.
# ---------------------------------------------------------------------------
def _init_params(key, input_dim, latent_dim, hidden1, hidden2, hidden3):
    """Deterministic synthetic init (torch nn.Linear convention: W is (out, in))."""
    ks = jax.random.split(key, 10)

    def lin(kw, kb, fan_in, fan_out):
        bound = 1.0 / jnp.sqrt(fan_in)
        w = jax.random.uniform(kw, (fan_out, fan_in), jnp.float32, -bound, bound)
        b = jax.random.uniform(kb, (fan_out,), jnp.float32, -bound, bound)
        return w, b

    w1, b1 = lin(ks[0], ks[1], input_dim, hidden1)
    w2, b2 = lin(ks[2], ks[3], hidden1, hidden2)
    w3, b3 = lin(ks[4], ks[5], hidden2, hidden3)
    wmu, bmu = lin(ks[6], ks[7], hidden3, latent_dim)
    wlv, blv = lin(ks[8], ks[9], hidden3, latent_dim)
    return dict(w1=w1, b1=b1, w2=w2, b2=b2, w3=w3, b3=b3,
                wmu=wmu, bmu=bmu, wlv=wlv, blv=blv)


def _reference(x, p):
    h = jnp.maximum(x @ p["w1"].T + p["b1"], 0.0)
    h = jnp.maximum(h @ p["w2"].T + p["b2"], 0.0)
    h = jnp.maximum(h @ p["w3"].T + p["b3"], 0.0)
    return h @ p["wmu"].T + p["bmu"], h @ p["wlv"].T + p["blv"]


if __name__ == "__main__":
    # Small shapes consistent with the module (defaults 1024/512/256 shrunk);
    # B chosen so the batch grid has 2 parallel steps (exercises v7x megacore).
    B, input_dim, latent_dim = 512, 64, 8
    hidden1, hidden2, hidden3 = 128, 64, 32

    key = jax.random.PRNGKey(0)
    kx, kp = jax.random.split(key)
    x = jax.random.normal(kx, (B, input_dim), jnp.float32)
    params = _init_params(kp, input_dim, latent_dim, hidden1, hidden2, hidden3)

    # One-time prep (transpose + fuse heads + pad to 128 lanes + bf16 cast).
    prep, meta = prepare_encoder_params(params, compute_dtype=jnp.bfloat16)

    mu, logvar = encoder_forward(x, prep, meta)
    mu = jax.block_until_ready(mu)
    logvar = jax.block_until_ready(logvar)

    mu_ref, logvar_ref = _reference(x, params)
    # bf16 matmul inputs with f32 accumulation -> loosened tolerance vs pure-f32 ref.
    assert mu.shape == mu_ref.shape and logvar.shape == logvar_ref.shape
    assert jnp.allclose(mu, mu_ref, atol=3e-2, rtol=3e-2), "mu mismatch"
    assert jnp.allclose(logvar, logvar_ref, atol=3e-2, rtol=3e-2), "logvar mismatch"

    print("KERNEL_OK")
</pallas_src>

<mosaic_0001>
module attributes {stable_mosaic.version = 11 : i64} {
  func.func @_encoder_kernel(%arg0: i32, %arg1: memref<256x128xf32, #tpu.memory_space<vmem>>, %arg2: memref<128x128xbf16, #tpu.memory_space<vmem>>, %arg3: memref<1x128xf32, #tpu.memory_space<vmem>>, %arg4: memref<128x128xbf16, #tpu.memory_space<vmem>>, %arg5: memref<1x128xf32, #tpu.memory_space<vmem>>, %arg6: memref<128x128xbf16, #tpu.memory_space<vmem>>, %arg7: memref<1x128xf32, #tpu.memory_space<vmem>>, %arg8: memref<128x128xbf16, #tpu.memory_space<vmem>>, %arg9: memref<1x128xf32, #tpu.memory_space<vmem>>, %arg10: memref<256x128xf32, #tpu.memory_space<vmem>>) attributes {dimension_semantics = [#tpu.dimension_semantics<parallel>], iteration_bounds = array<i64: 2>, scalar_prefetch = 0 : i64, scratch_operands = 0 : i64, tpu.core_type = #tpu.core_type<tc>, window_params = [{transform_indices = @transform_0, window_bounds = array<i64: 256, 128>}, {pipeline_mode = #tpu.pipeline_mode<synchronous>, transform_indices = @transform_1, window_bounds = array<i64: 128, 128>}, {pipeline_mode = #tpu.pipeline_mode<synchronous>, transform_indices = @transform_2, window_bounds = array<i64: 1, 128>}, {pipeline_mode = #tpu.pipeline_mode<synchronous>, transform_indices = @transform_3, window_bounds = array<i64: 128, 128>}, {pipeline_mode = #tpu.pipeline_mode<synchronous>, transform_indices = @transform_4, window_bounds = array<i64: 1, 128>}, {pipeline_mode = #tpu.pipeline_mode<synchronous>, transform_indices = @transform_5, window_bounds = array<i64: 128, 128>}, {pipeline_mode = #tpu.pipeline_mode<synchronous>, transform_indices = @transform_6, window_bounds = array<i64: 1, 128>}, {pipeline_mode = #tpu.pipeline_mode<synchronous>, transform_indices = @transform_7, window_bounds = array<i64: 128, 128>}, {pipeline_mode = #tpu.pipeline_mode<synchronous>, transform_indices = @transform_8, window_bounds = array<i64: 1, 128>}, {transform_indices = @transform_9, window_bounds = array<i64: 256, 128>}]} {
    %c0 = arith.constant 0 : index
    %c0_0 = arith.constant 0 : index
    %0 = vector.load %arg1[%c0, %c0_0] : memref<256x128xf32, #tpu.memory_space<vmem>>, vector<256x128xf32>
    %1 = arith.truncf %0 : vector<256x128xf32> to vector<256x128xbf16>
    %c0_1 = arith.constant 0 : index
    %c0_2 = arith.constant 0 : index
    %2 = vector.load %arg2[%c0_1, %c0_2] : memref<128x128xbf16, #tpu.memory_space<vmem>>, vector<128x128xbf16>
    %cst = arith.constant dense<0.000000e+00> : vector<256x128xf32>
    %3 = tpu.matmul %1, %2, %cst {dimension_numbers = #tpu.dot_dimension_numbers<[1], [0], [0], [1], [0, 0, 1, 1], [], []>} : vector<256x128xbf16>, vector<128x128xbf16>, vector<256x128xf32> -> vector<256x128xf32>
    %c0_3 = arith.constant 0 : index
    %c0_4 = arith.constant 0 : index
    %4 = vector.load %arg3[%c0_3, %c0_4] : memref<1x128xf32, #tpu.memory_space<vmem>>, vector<1x128xf32>
    %5 = vector.broadcast %4 : vector<1x128xf32> to vector<256x128xf32>
    %6 = arith.addf %3, %5 : vector<256x128xf32>
    %cst_5 = arith.constant 0.000000e+00 : f32
    %7 = vector.broadcast %cst_5 : f32 to vector<256x128xf32>
    %8 = arith.maximumf %6, %7 : vector<256x128xf32>
    %9 = arith.truncf %8 : vector<256x128xf32> to vector<256x128xbf16>
    %c0_6 = arith.constant 0 : index
    %c0_7 = arith.constant 0 : index
    %10 = vector.load %arg4[%c0_6, %c0_7] : memref<128x128xbf16, #tpu.memory_space<vmem>>, vector<128x128xbf16>
    %cst_8 = arith.constant dense<0.000000e+00> : vector<256x128xf32>
    %11 = tpu.matmul %9, %10, %cst_8 {dimension_numbers = #tpu.dot_dimension_numbers<[1], [0], [0], [1], [0, 0, 1, 1], [], []>} : vector<256x128xbf16>, vector<128x128xbf16>, vector<256x128xf32> -> vector<256x128xf32>
    %c0_9 = arith.constant 0 : index
    %c0_10 = arith.constant 0 : index
    %12 = vector.load %arg5[%c0_9, %c0_10] : memref<1x128xf32, #tpu.memory_space<vmem>>, vector<1x128xf32>
    %13 = vector.broadcast %12 : vector<1x128xf32> to vector<256x128xf32>
    %14 = arith.addf %11, %13 : vector<256x128xf32>
    %cst_11 = arith.constant 0.000000e+00 : f32
    %15 = vector.broadcast %cst_11 : f32 to vector<256x128xf32>
    %16 = arith.maximumf %14, %15 : vector<256x128xf32>
    %17 = arith.truncf %16 : vector<256x128xf32> to vector<256x128xbf16>
    %c0_12 = arith.constant 0 : index
    %c0_13 = arith.constant 0 : index
    %18 = vector.load %arg6[%c0_12, %c0_13] : memref<128x128xbf16, #tpu.memory_space<vmem>>, vector<128x128xbf16>
    %cst_14 = arith.constant dense<0.000000e+00> : vector<256x128xf32>
    %19 = tpu.matmul %17, %18, %cst_14 {dimension_numbers = #tpu.dot_dimension_numbers<[1], [0], [0], [1], [0, 0, 1, 1], [], []>} : vector<256x128xbf16>, vector<128x128xbf16>, vector<256x128xf32> -> vector<256x128xf32>
    %c0_15 = arith.constant 0 : index
    %c0_16 = arith.constant 0 : index
    %20 = vector.load %arg7[%c0_15, %c0_16] : memref<1x128xf32, #tpu.memory_space<vmem>>, vector<1x128xf32>
    %21 = vector.broadcast %20 : vector<1x128xf32> to vector<256x128xf32>
    %22 = arith.addf %19, %21 : vector<256x128xf32>
    %cst_17 = arith.constant 0.000000e+00 : f32
    %23 = vector.broadcast %cst_17 : f32 to vector<256x128xf32>
    %24 = arith.maximumf %22, %23 : vector<256x128xf32>
    %25 = arith.truncf %24 : vector<256x128xf32> to vector<256x128xbf16>
    %c0_18 = arith.constant 0 : index
    %c0_19 = arith.constant 0 : index
    %26 = vector.load %arg8[%c0_18, %c0_19] : memref<128x128xbf16, #tpu.memory_space<vmem>>, vector<128x128xbf16>
    %cst_20 = arith.constant dense<0.000000e+00> : vector<256x128xf32>
    %27 = tpu.matmul %25, %26, %cst_20 {dimension_numbers = #tpu.dot_dimension_numbers<[1], [0], [0], [1], [0, 0, 1, 1], [], []>} : vector<256x128xbf16>, vector<128x128xbf16>, vector<256x128xf32> -> vector<256x128xf32>
    %c0_21 = arith.constant 0 : index
    %c0_22 = arith.constant 0 : index
    %28 = vector.load %arg9[%c0_21, %c0_22] : memref<1x128xf32, #tpu.memory_space<vmem>>, vector<1x128xf32>
    %29 = vector.broadcast %28 : vector<1x128xf32> to vector<256x128xf32>
    %30 = arith.addf %27, %29 : vector<256x128xf32>
    %c0_23 = arith.constant 0 : index
    %c0_24 = arith.constant 0 : index
    %31 = vector.load %arg10[%c0_23, %c0_24] : memref<256x128xf32, #tpu.memory_space<vmem>>, vector<256x128xf32>
    tpu.vector_store %arg10[%c0_23, %c0_24], %30 {strides = array<i32>} : memref<256x128xf32, #tpu.memory_space<vmem>>, vector<256x128xf32>,
    return
  }
  func.func @transform_0(%arg0: i32) -> (i32, i32) {
    %c0_i32 = arith.constant 0 : i32
    %c0_i32_0 = arith.constant 0 : i32
    return %arg0, %c0_i32 : i32, i32
  }
  func.func @transform_1(%arg0: i32) -> (i32, i32) {
    %c0_i32 = arith.constant 0 : i32
    %c0_i32_0 = arith.constant 0 : i32
    %c0_i32_1 = arith.constant 0 : i32
    return %c0_i32, %c0_i32_0 : i32, i32
  }
  func.func @transform_2(%arg0: i32) -> (i32, i32) {
    %c0_i32 = arith.constant 0 : i32
    %c0_i32_0 = arith.constant 0 : i32
    %c0_i32_1 = arith.constant 0 : i32
    return %c0_i32, %c0_i32_0 : i32, i32
  }
  func.func @transform_3(%arg0: i32) -> (i32, i32) {
    %c0_i32 = arith.constant 0 : i32
    %c0_i32_0 = arith.constant 0 : i32
    %c0_i32_1 = arith.constant 0 : i32
    return %c0_i32, %c0_i32_0 : i32, i32
  }
  func.func @transform_4(%arg0: i32) -> (i32, i32) {
    %c0_i32 = arith.constant 0 : i32
    %c0_i32_0 = arith.constant 0 : i32
    %c0_i32_1 = arith.constant 0 : i32
    return %c0_i32, %c0_i32_0 : i32, i32
  }
  func.func @transform_5(%arg0: i32) -> (i32, i32) {
    %c0_i32 = arith.constant 0 : i32
    %c0_i32_0 = arith.constant 0 : i32
    %c0_i32_1 = arith.constant 0 : i32
    return %c0_i32, %c0_i32_0 : i32, i32
  }
  func.func @transform_6(%arg0: i32) -> (i32, i32) {
    %c0_i32 = arith.constant 0 : i32
    %c0_i32_0 = arith.constant 0 : i32
    %c0_i32_1 = arith.constant 0 : i32
    return %c0_i32, %c0_i32_0 : i32, i32
  }
  func.func @transform_7(%arg0: i32) -> (i32, i32) {
    %c0_i32 = arith.constant 0 : i32
    %c0_i32_0 = arith.constant 0 : i32
    %c0_i32_1 = arith.constant 0 : i32
    return %c0_i32, %c0_i32_0 : i32, i32
  }
  func.func @transform_8(%arg0: i32) -> (i32, i32) {
    %c0_i32 = arith.constant 0 : i32
    %c0_i32_0 = arith.constant 0 : i32
    %c0_i32_1 = arith.constant 0 : i32
    return %c0_i32, %c0_i32_0 : i32, i32
  }
  func.func @transform_9(%arg0: i32) -> (i32, i32) {
    %c0_i32 = arith.constant 0 : i32
    %c0_i32_0 = arith.constant 0 : i32
    return %arg0, %c0_i32 : i32, i32
  }
}

</mosaic_0001>

<llo_original>
// kernel: tpu_custom_call.1
$region0: #{tpu_custom_call.1}
  #allocation0 [shape = 'u32[]', space=smem, size = 0x4, offset = 0x4, fixed_abs, tag = 'smem constant byte address 0x4 - core index']
  #allocation1 [shape = 'u32[144,128]{1,0:T(1,128)}', space=vmem, size = 0x12000, scoped, tag = 'internal scratch']
  %s0 = inlined_call_operand.hbm [shape: f32[512,128], index: 0, kind: input, shape index: {}]
  %s1 = inlined_call_operand.hbm [shape: bf16[128,128], index: 1, kind: input, shape index: {}]
  %s2 = inlined_call_operand.vmem [shape: f32[1,128], index: 2, kind: input, shape index: {}]
  %s3 = inlined_call_operand.hbm [shape: bf16[128,128], index: 3, kind: input, shape index: {}]
  %s4 = inlined_call_operand.vmem [shape: f32[1,128], index: 4, kind: input, shape index: {}]
  %s5 = inlined_call_operand.hbm [shape: bf16[128,128], index: 5, kind: input, shape index: {}]
  %s6 = inlined_call_operand.vmem [shape: f32[1,128], index: 6, kind: input, shape index: {}]
  %s7 = inlined_call_operand.hbm [shape: bf16[128,128], index: 7, kind: input, shape index: {}]
  %s8 = inlined_call_operand.vmem [shape: f32[1,128], index: 8, kind: input, shape index: {}]
  %s9 = inlined_call_operand.hbm [shape: f32[512,128], index: 9, kind: output, shape index: {}]
  %s10 = sld [smem:[#allocation0]]
  $region89: #{tpu_custom_call.1} parent=0
    _
  %s12 = ssub.s32 1, %s10
  %s13 = scalar_select 0, %s12, %s10
  $region1: #{tpu_custom_call.1} parent=0
    #allocation2 [shape = 'u8[262144]{0}', space=vmem, size = 0x40000, scoped, tag = 'input window, operand 0']
    #allocation3 [shape = 's32[2]{0}', space=sflag, size = 0x8, scoped, tag = 'scoped memory for tpu_custom_call.1']
    #allocation4 [shape = 's32[2]{0}', space=sflag, size = 0x8, scoped, tag = 'scoped memory for tpu_custom_call.1']
    #allocation5 [shape = 'u8[32768]{0}', space=vmem, size = 0x8000, scoped, tag = 'input window, operand 1, single buffered']
    #allocation6 [shape = 's32[1]{0}', space=sflag, size = 0x4, scoped, tag = 'scoped memory for tpu_custom_call.1']
    #allocation7 [shape = 'u8[32768]{0}', space=vmem, size = 0x8000, scoped, tag = 'input window, operand 3, single buffered']
    #allocation8 [shape = 'u8[32768]{0}', space=vmem, size = 0x8000, scoped, tag = 'input window, operand 5, single buffered']
    #allocation9 [shape = 's32[1]{0}', space=sflag, size = 0x4, scoped, tag = 'scoped memory for tpu_custom_call.1']
    #allocation10 [shape = 'u8[32768]{0}', space=vmem, size = 0x8000, scoped, tag = 'input window, operand 7, single buffered']
    #allocation11 [shape = 'u8[262144]{0}', space=vmem, size = 0x40000, scoped, tag = 'output window, operand 0']
    %14 = vsyncpa [#allocation3], 0
    %s15 = scalar_lea.sflag [#allocation3], 1
    %16 = vsyncpa %s15, 0
    %17 = vsyncpa [#allocation6], 0
    %18 = vsyncpa [#allocation9], 0
    %19 = vsyncpa [#allocation4], 0
    %s20 = scalar_lea.sflag [#allocation4], 1
    %21 = vsyncpa %s20, 0
    loop: start=0, step=1, limit=4
    $region2: #{tpu_custom_call.1} parent=1 // loop_pre_header
      _
    $region3: #{tpu_custom_call.1} parent=1 // loop_header
      %s23 = sphi 0, %s27
      %p24 = scmp.ge.s32.totalorder %s23, 4
      %s33 = sphi 0, %s35
      %s36 = sphi 0, %s33
      %s37 = sphi 0, %s36
      %s53 = sphi 0, %s37
      %s57 = sphi 0, %s57
      %s59 = sphi 0, %s57
      %s60 = sphi 0, %s59
      %s74 = sphi 0, %s60
      %s78 = sphi 0, %s78
      %s80 = sphi 0, %s78
      %s81 = sphi 0, %s80
      %s95 = sphi 0, %s81
      %s99 = sphi 0, %s99
      %s101 = sphi 0, %s99
      %s102 = sphi 0, %s101
      %s116 = sphi 0, %s102
      %s120 = sphi 0, %s120
      %s122 = sphi 0, %s120
      %s123 = sphi 0, %s122
      %s137 = sphi 0, %s123
      %s141 = sphi 0, %s141
      %s143 = sphi 0, %s141
      %s144 = sphi 0, %s143
      %s158 = sphi 0, %s144
      %s162 = sphi 0, %s162
      %s164 = sphi 0, %s162
      %s165 = sphi 0, %s164
      %s179 = sphi 0, %s165
      %s183 = sphi 0, %s183
      %s185 = sphi 0, %s183
      %s186 = sphi 0, %s185
      %s200 = sphi 0, %s186
      %s204 = sphi 0, %s204
      %s206 = sphi 0, %s204
      %s207 = sphi 0, %s206
      %s221 = sphi 0, %s207
      %s227 = sphi 0, %s229
      %s230 = sphi 0, %s227
      %s231 = sphi 0, %s230
      %s247 = sphi 0, %s231
    $region4: #{tpu_custom_call.1} parent=1 // loop_header_branch
      %26 = sbr.rel (%p24) target = $region8
    $region5: #{tpu_custom_call.1} parent=1 // loop_body
      %s28 = ssub.s32 %s23, 1
      %s29 = ssub.s32 %s23, 2
      %s30 = sadd.s32 %s23, 1
      %s31 = ssub.s32 %s23, %s30
      %p32 = scmp.eq.s32.totalorder %s31, 0
      %s34 = sadd.s32 %s33, 1
      %s35 = scalar_select %p32, %s33, %s34
      %p38 = pneg %p32
      %p39 = scmp.eq.s32.totalorder %s23, 1
      %p40 = por %p38, %p39
      %p41 = scmp.ne.s32.totalorder %s33, %s36
      %p42 = scmp.eq.s32.totalorder %s23, 0
      %p43 = por %p41, %p42
      %p44 = scmp.ne.s32.totalorder %s33, %s36
      %p45 = scmp.eq.s32.totalorder %s28, 1
      %p46 = por %p44, %p45
      %p47 = scmp.ne.s32.totalorder %s36, %s37
      %p48 = scmp.eq.s32.totalorder %s28, 0
      %p49 = por %p47, %p48
      %p50 = scmp.ne.s32.totalorder %s36, %s37
      %p51 = scmp.eq.s32.totalorder %s29, 1
      %p52 = por %p50, %p51
      %p54 = scmp.ne.s32.totalorder %s37, %s53
      %p55 = scmp.eq.s32.totalorder %s29, 0
      %p56 = por %p54, %p55
      %s58 = sadd.s32 %s57, 1
      %p61 = scmp.eq.s32.totalorder %s23, 1
      %p62 = scmp.ne.s32.totalorder %s57, %s59
      %p63 = scmp.eq.s32.totalorder %s23, 0
      %p64 = por %p62, %p63
      %p65 = scmp.ne.s32.totalorder %s57, %s59
      %p66 = scmp.eq.s32.totalorder %s28, 1
      %p67 = por %p65, %p66
      %p68 = scmp.ne.s32.totalorder %s59, %s60
      %p69 = scmp.eq.s32.totalorder %s28, 0
      %p70 = por %p68, %p69
      %p71 = scmp.ne.s32.totalorder %s59, %s60
      %p72 = scmp.eq.s32.totalorder %s29, 1
      %p73 = por %p71, %p72
      %p75 = scmp.ne.s32.totalorder %s60, %s74
      %p76 = scmp.eq.s32.totalorder %s29, 0
      %p77 = por %p75, %p76
      %s79 = sadd.s32 %s78, 1
      %p82 = scmp.eq.s32.totalorder %s23, 1
      %p83 = scmp.ne.s32.totalorder %s78, %s80
      %p84 = scmp.eq.s32.totalorder %s23, 0
      %p85 = por %p83, %p84
      %p86 = scmp.ne.s32.totalorder %s78, %s80
      %p87 = scmp.eq.s32.totalorder %s28, 1
      %p88 = por %p86, %p87
      %p89 = scmp.ne.s32.totalorder %s80, %s81
      %p90 = scmp.eq.s32.totalorder %s28, 0
      %p91 = por %p89, %p90
      %p92 = scmp.ne.s32.totalorder %s80, %s81
      %p93 = scmp.eq.s32.totalorder %s29, 1
      %p94 = por %p92, %p93
      %p96 = scmp.ne.s32.totalorder %s81, %s95
      %p97 = scmp.eq.s32.totalorder %s29, 0
      %p98 = por %p96, %p97
      %s100 = sadd.s32 %s99, 1
      %p103 = scmp.eq.s32.totalorder %s23, 1
      %p104 = scmp.ne.s32.totalorder %s99, %s101
      %p105 = scmp.eq.s32.totalorder %s23, 0
      %p106 = por %p104, %p105
      %p107 = scmp.ne.s32.totalorder %s99, %s101
      %p108 = scmp.eq.s32.totalorder %s28, 1
      %p109 = por %p107, %p108
      %p110 = scmp.ne.s32.totalorder %s101, %s102
      %p111 = scmp.eq.s32.totalorder %s28, 0
      %p112 = por %p110, %p111
      %p113 = scmp.ne.s32.totalorder %s101, %s102
      %p114 = scmp.eq.s32.totalorder %s29, 1
      %p115 = por %p113, %p114
      %p117 = scmp.ne.s32.totalorder %s102, %s116
      %p118 = scmp.eq.s32.totalorder %s29, 0
      %p119 = por %p117, %p118
      %s121 = sadd.s32 %s120, 1
      %p124 = scmp.eq.s32.totalorder %s23, 1
      %p125 = scmp.ne.s32.totalorder %s120, %s122
      %p126 = scmp.eq.s32.totalorder %s23, 0
      %p127 = por %p125, %p126
      %p128 = scmp.ne.s32.totalorder %s120, %s122
      %p129 = scmp.eq.s32.totalorder %s28, 1
      %p130 = por %p128, %p129
      %p131 = scmp.ne.s32.totalorder %s122, %s123
      %p132 = scmp.eq.s32.totalorder %s28, 0
      %p133 = por %p131, %p132
      %p134 = scmp.ne.s32.totalorder %s122, %s123
      %p135 = scmp.eq.s32.totalorder %s29, 1
      %p136 = por %p134, %p135
      %p138 = scmp.ne.s32.totalorder %s123, %s137
      %p139 = scmp.eq.s32.totalorder %s29, 0
      %p140 = por %p138, %p139
      %s142 = sadd.s32 %s141, 1
      %p145 = scmp.eq.s32.totalorder %s23, 1
      %p146 = scmp.ne.s32.totalorder %s141, %s143
      %p147 = scmp.eq.s32.totalorder %s23, 0
      %p148 = por %p146, %p147
      %p149 = scmp.ne.s32.totalorder %s141, %s143
      %p150 = scmp.eq.s32.totalorder %s28, 1
      %p151 = por %p149, %p150
      %p152 = scmp.ne.s32.totalorder %s143, %s144
      %p153 = scmp.eq.s32.totalorder %s28, 0
      %p154 = por %p152, %p153
      %p155 = scmp.ne.s32.totalorder %s143, %s144
      %p156 = scmp.eq.s32.totalorder %s29, 1
      %p157 = por %p155, %p156
      %p159 = scmp.ne.s32.totalorder %s144, %s158
      %p160 = scmp.eq.s32.totalorder %s29, 0
      %p161 = por %p159, %p160
      %s163 = sadd.s32 %s162, 1
      %p166 = scmp.eq.s32.totalorder %s23, 1
      %p167 = scmp.ne.s32.totalorder %s162, %s164
      %p168 = scmp.eq.s32.totalorder %s23, 0
      %p169 = por %p167, %p168
      %p170 = scmp.ne.s32.totalorder %s162, %s164
      %p171 = scmp.eq.s32.totalorder %s28, 1
      %p172 = por %p170, %p171
      %p173 = scmp.ne.s32.totalorder %s164, %s165
      %p174 = scmp.eq.s32.totalorder %s28, 0
      %p175 = por %p173, %p174
      %p176 = scmp.ne.s32.totalorder %s164, %s165
      %p177 = scmp.eq.s32.totalorder %s29, 1
      %p178 = por %p176, %p177
      %p180 = scmp.ne.s32.totalorder %s165, %s179
      %p181 = scmp.eq.s32.totalorder %s29, 0
      %p182 = por %p180, %p181
      %s184 = sadd.s32 %s183, 1
      %p187 = scmp.eq.s32.totalorder %s23, 1
      %p188 = scmp.ne.s32.totalorder %s183, %s185
      %p189 = scmp.eq.s32.totalorder %s23, 0
      %p190 = por %p188, %p189
      %p191 = scmp.ne.s32.totalorder %s183, %s185
      %p192 = scmp.eq.s32.totalorder %s28, 1
      %p193 = por %p191, %p192
      %p194 = scmp.ne.s32.totalorder %s185, %s186
      %p195 = scmp.eq.s32.totalorder %s28, 0
      %p196 = por %p194, %p195
      %p197 = scmp.ne.s32.totalorder %s185, %s186
      %p198 = scmp.eq.s32.totalorder %s29, 1
      %p199 = por %p197, %p198
      %p201 = scmp.ne.s32.totalorder %s186, %s200
      %p202 = scmp.eq.s32.totalorder %s29, 0
      %p203 = por %p201, %p202
      %s205 = sadd.s32 %s204, 1
      %p208 = scmp.eq.s32.totalorder %s23, 1
      %p209 = scmp.ne.s32.totalorder %s204, %s206
      %p210 = scmp.eq.s32.totalorder %s23, 0
      %p211 = por %p209, %p210
      %p212 = scmp.ne.s32.totalorder %s204, %s206
      %p213 = scmp.eq.s32.totalorder %s28, 1
      %p214 = por %p212, %p213
      %p215 = scmp.ne.s32.totalorder %s206, %s207
      %p216 = scmp.eq.s32.totalorder %s28, 0
      %p217 = por %p215, %p216
      %p218 = scmp.ne.s32.totalorder %s206, %s207
      %p219 = scmp.eq.s32.totalorder %s29, 1
      %p220 = por %p218, %p219
      %p222 = scmp.ne.s32.totalorder %s207, %s221
      %p223 = scmp.eq.s32.totalorder %s29, 0
      %p224 = por %p222, %p223
      %s225 = ssub.s32 %s23, %s30
      %p226 = scmp.eq.s32.totalorder %s225, 0
      %s228 = sadd.s32 %s227, 1
      %s229 = scalar_select %p226, %s227, %s228
      %p232 = pneg %p226
      %p233 = scmp.eq.s32.totalorder %s23, 1
      %p234 = por %p232, %p233
      %p235 = scmp.ne.s32.totalorder %s227, %s230
      %p236 = scmp.eq.s32.totalorder %s23, 0
      %p237 = por %p235, %p236
      %p238 = scmp.ne.s32.totalorder %s227, %s230
      %p239 = scmp.eq.s32.totalorder %s28, 1
      %p240 = por %p238, %p239
      %p241 = scmp.ne.s32.totalorder %s230, %s231
      %p242 = scmp.eq.s32.totalorder %s28, 0
      %p243 = por %p241, %p242
      %p244 = scmp.ne.s32.totalorder %s230, %s231
      %p245 = scmp.eq.s32.totalorder %s29, 1
      %p246 = por %p244, %p245
      %p248 = scmp.ne.s32.totalorder %s231, %s247
      %p249 = scmp.eq.s32.totalorder %s29, 0
      %p250 = por %p248, %p249
      %p251 = scmp.le.s32.totalorder 1, %s23
      %p252 = scmp.lt.s32.totalorder %s23, 3
      %p253 = pnand %p251, %p252
      %p254 = pneg %p253
      // Predicated region
      $region9: #{tpu_custom_call.1} parent=5 // pred_check
        _
      $region10: #{tpu_custom_call.1} parent=5 // pred_check_branch
        %256 = sbr.rel (%p253) target = $region12
      $region11: #{tpu_custom_call.1} parent=5 // pred_region
        %s257 = ssub.s32 %s23, 1
        // Predicated region
        $region13: #{tpu_custom_call.1} parent=11 // pred_check
          %p258 = pneg %p70
        $region14: #{tpu_custom_call.1} parent=11 // pred_check_branch
          %260 = sbr.rel (%p258) target = $region16
        $region15: #{tpu_custom_call.1} parent=11 // pred_region
          %s262 = ssub.s32 1024, 1024
          %263 = vsyncadd [#allocation6], %s262
          %s264 = sshll.u32 [#allocation5], 4
          %s265 = int_to_ptr.vmem [resolvable:$true] %s264
          %270 = dma.hbm_to_vmem [thread:$0]  %s1, 1024, %s265, [#allocation6], 64, 64, 4
        $region16: #{tpu_custom_call.1} parent=11 // pred_fallthru
          _
        // Predicated region
        $region17: #{tpu_custom_call.1} parent=11 // pred_check
          %p271 = pneg %p91
        $region18: #{tpu_custom_call.1} parent=11 // pred_check_branch
          %273 = sbr.rel (%p271) target = $region20
        $region19: #{tpu_custom_call.1} parent=11 // pred_region
          _
        $region20: #{tpu_custom_call.1} parent=11 // pred_fallthru
          _
        // Predicated region
        $region21: #{tpu_custom_call.1} parent=11 // pred_check
          %p274 = pneg %p112
        $region22: #{tpu_custom_call.1} parent=11 // pred_check_branch
          %276 = sbr.rel (%p274) target = $region24
        $region23: #{tpu_custom_call.1} parent=11 // pred_region
          %s278 = ssub.s32 1024, 1024
          %279 = vsyncadd [#allocation6], %s278
          %s280 = sshll.u32 [#allocation7], 4
          %s281 = int_to_ptr.vmem [resolvable:$true] %s280
          %286 = dma.hbm_to_vmem [thread:$0]  %s3, 1024, %s281, [#allocation6], 64, 64, 4
        $region24: #{tpu_custom_call.1} parent=11 // pred_fallthru
          _
        // Predicated region
        $region25: #{tpu_custom_call.1} parent=11 // pred_check
          %p287 = pneg %p133
        $region26: #{tpu_custom_call.1} parent=11 // pred_check_branch
          %289 = sbr.rel (%p287) target = $region28
        $region27: #{tpu_custom_call.1} parent=11 // pred_region
          _
        $region28: #{tpu_custom_call.1} parent=11 // pred_fallthru
          _
        // Predicated region
        $region29: #{tpu_custom_call.1} parent=11 // pred_check
          %p290 = pneg %p154
        $region30: #{tpu_custom_call.1} parent=11 // pred_check_branch
          %292 = sbr.rel (%p290) target = $region32
        $region31: #{tpu_custom_call.1} parent=11 // pred_region
          %s294 = ssub.s32 1024, 1024
          %295 = vsyncadd [#allocation9], %s294
          %s296 = sshll.u32 [#allocation8], 4
          %s297 = int_to_ptr.vmem [resolvable:$true] %s296
          %302 = dma.hbm_to_vmem [thread:$0]  %s5, 1024, %s297, [#allocation9], 64, 64, 4
        $region32: #{tpu_custom_call.1} parent=11 // pred_fallthru
          _
        // Predicated region
        $region33: #{tpu_custom_call.1} parent=11 // pred_check
          %p303 = pneg %p175
        $region34: #{tpu_custom_call.1} parent=11 // pred_check_branch
          %305 = sbr.rel (%p303) target = $region36
        $region35: #{tpu_custom_call.1} parent=11 // pred_region
          _
        $region36: #{tpu_custom_call.1} parent=11 // pred_fallthru
          _
        // Predicated region
        $region37: #{tpu_custom_call.1} parent=11 // pred_check
          %p306 = pneg %p196
        $region38: #{tpu_custom_call.1} parent=11 // pred_check_branch
          %308 = sbr.rel (%p306) target = $region40
        $region39: #{tpu_custom_call.1} parent=11 // pred_region
          %s310 = ssub.s32 1024, 1024
          %311 = vsyncadd [#allocation9], %s310
          %s312 = sshll.u32 [#allocation10], 4
          %s313 = int_to_ptr.vmem [resolvable:$true] %s312
          %318 = dma.hbm_to_vmem [thread:$0]  %s7, 1024, %s313, [#allocation9], 64, 64, 4
        $region40: #{tpu_custom_call.1} parent=11 // pred_fallthru
          _
        // Predicated region
        $region41: #{tpu_custom_call.1} parent=11 // pred_check
          %p319 = pneg %p217
        $region42: #{tpu_custom_call.1} parent=11 // pred_check_branch
          %321 = sbr.rel (%p319) target = $region44
        $region43: #{tpu_custom_call.1} parent=11 // pred_region
          _
        $region44: #{tpu_custom_call.1} parent=11 // pred_fallthru
          _
      $region12: #{tpu_custom_call.1} parent=5 // pred_fallthru
        _
      %p322 = scmp.lt.s32.totalorder %s23, 2
      // Predicated region
      $region45: #{tpu_custom_call.1} parent=5 // pred_check
        %p323 = pneg %p322
      $region46: #{tpu_custom_call.1} parent=5 // pred_check_branch
        %325 = sbr.rel (%p323) target = $region48
      $region47: #{tpu_custom_call.1} parent=5 // pred_region
        // Predicated region
        $region49: #{tpu_custom_call.1} parent=47 // pred_check
          %p326 = pneg %p43
        $region50: #{tpu_custom_call.1} parent=47 // pred_check_branch
          %328 = sbr.rel (%p326) target = $region52
        $region51: #{tpu_custom_call.1} parent=47 // pred_region
          %s329 = sand.u32 %s33, 1
          %s330 = scalar_lea.sflag [#allocation3], %s329
          %s331 = sand.u32 %s33, 1
          %s332 = smul.addr %s331, 256
          %s333 = scalar_lea.vmem [#allocation2], %s332
          %s334 = smul.u32 32, %s23
          %s336 = ssub.s32 4096, 4096
          %337 = vsyncadd %s330, %s336
          %s338 = smul.addr %s334, 128
          %s339 = scalar_lea.hbm %s0, %s338
          %s340 = sshll.u32 %s333, 4
          %s341 = int_to_ptr.vmem [resolvable:$true] %s340
          %346 = dma.hbm_to_vmem [thread:$0]  %s339, 4096, %s341, %s330, 128, 128, 8
        $region52: #{tpu_custom_call.1} parent=47 // pred_fallthru
          _
      $region48: #{tpu_custom_call.1} parent=5 // pred_fallthru
        _
      %p347 = scmp.le.s32.totalorder 1, %s23
      %p348 = scmp.lt.s32.totalorder %s23, 3
      %p349 = pnand %p347, %p348
      %p350 = pneg %p349
      // Predicated region
      $region53: #{tpu_custom_call.1} parent=5 // pred_check
        _
      $region54: #{tpu_custom_call.1} parent=5 // pred_check_branch
        %352 = sbr.rel (%p349) target = $region56
      $region55: #{tpu_custom_call.1} parent=5 // pred_region
        %s353 = ssub.s32 %s23, 1
        %s354 = sand.u32 %s36, 1
        %s355 = scalar_lea.sflag [#allocation3], %s354
        %s356 = sand.u32 %s36, 1
        %s357 = smul.addr %s356, 256
        %s358 = scalar_lea.vmem [#allocation2], %s357
        // Predicated region
        $region57: #{tpu_custom_call.1} parent=55 // pred_check
          %p359 = pneg %p49
        $region58: #{tpu_custom_call.1} parent=55 // pred_check_branch
          %361 = sbr.rel (%p359) target = $region60
        $region59: #{tpu_custom_call.1} parent=55 // pred_region
          %362 = dma.done %s355, 4096
        $region60: #{tpu_custom_call.1} parent=55 // pred_fallthru
          _
        // Predicated region
        $region61: #{tpu_custom_call.1} parent=55 // pred_check
          %p363 = pneg %p70
        $region62: #{tpu_custom_call.1} parent=55 // pred_check_branch
          %365 = sbr.rel (%p363) target = $region64
        $region63: #{tpu_custom_call.1} parent=55 // pred_region
          %366 = dma.done [#allocation6], 1024
        $region64: #{tpu_custom_call.1} parent=55 // pred_fallthru
          _
        // Predicated region
        $region65: #{tpu_custom_call.1} parent=55 // pred_check
          %p367 = pneg %p112
        $region66: #{tpu_custom_call.1} parent=55 // pred_check_branch
          %369 = sbr.rel (%p367) target = $region68
        $region67: #{tpu_custom_call.1} parent=55 // pred_region
          %370 = dma.done [#allocation6], 1024
        $region68: #{tpu_custom_call.1} parent=55 // pred_fallthru
          _
        // Predicated region
        $region69: #{tpu_custom_call.1} parent=55 // pred_check
          %p371 = pneg %p154
        $region70: #{tpu_custom_call.1} parent=55 // pred_check_branch
          %373 = sbr.rel (%p371) target = $region72
        $region71: #{tpu_custom_call.1} parent=55 // pred_region
          %374 = dma.done [#allocation9], 1024
        $region72: #{tpu_custom_call.1} parent=55 // pred_fallthru
          _
        // Predicated region
        $region73: #{tpu_custom_call.1} parent=55 // pred_check
          %p375 = pneg %p196
        $region74: #{tpu_custom_call.1} parent=55 // pred_check_branch
          %377 = sbr.rel (%p375) target = $region76
        $region75: #{tpu_custom_call.1} parent=55 // pred_region
          %378 = dma.done [#allocation9], 1024
        $region76: #{tpu_custom_call.1} parent=55 // pred_fallthru
          _
        %s379 = sand.u32 %s36, 1
        %s380 = scalar_lea.sflag [#allocation3], %s379
        %s381 = sand.u32 %s36, 1
        %s382 = smul.addr %s381, 256
        %s383 = scalar_lea.vmem [#allocation2], %s382
        %p384 = pneg %p49
        %p385 = pneg %p46
        %p386 = pneg %p70
        %p387 = pneg %p67
        %p388 = pneg %p91
        %p389 = pneg %p88
        %p390 = pneg %p112
        %p391 = pneg %p109
        %p392 = pneg %p133
        %p393 = pneg %p130
        %p394 = pneg %p154
        %p395 = pneg %p151
        %p396 = pneg %p175
        %p397 = pneg %p172
        %p398 = pneg %p196
        %p399 = pneg %p193
        %p400 = pneg %p217
        %p401 = pneg %p214
        %p402 = pneg %p243
        %p403 = pneg %p240
        %s404 = sand.u32 %s230, 1
        %s405 = scalar_lea.sflag [#allocation4], %s404
        %s406 = sand.u32 %s230, 1
        %s407 = smul.addr %s406, 256
        %s408 = scalar_lea.vmem [#allocation11], %s407
        %s409 = smul.u32 32, %s28
        %s410 = smul.u32 32, %s28
        %v412 = vld [vmem:[%s358] sm:$0xff]
        %v413 = vld [vmem:[%s358 + $0x8] sm:$0xff]
        %v414 = vld [vmem:[%s358 + $0x10] sm:$0xff]
        %v415 = vld [vmem:[%s358 + $0x18] sm:$0xff]
        %v416 = vld [vmem:[%s358 + $0x20] sm:$0xff]
        %v417 = vld [vmem:[%s358 + $0x28] sm:$0xff]
        %v418 = vld [vmem:[%s358 + $0x30] sm:$0xff]
        %v419 = vld [vmem:[%s358 + $0x38] sm:$0xff]
        %v420 = vld [vmem:[%s358 + $0x40] sm:$0xff]
        %v421 = vld [vmem:[%s358 + $0x48] sm:$0xff]
        %v422 = vld [vmem:[%s358 + $0x50] sm:$0xff]
        %v423 = vld [vmem:[%s358 + $0x58] sm:$0xff]
        %v424 = vld [vmem:[%s358 + $0x60] sm:$0xff]
        %v425 = vld [vmem:[%s358 + $0x68] sm:$0xff]
        %v426 = vld [vmem:[%s358 + $0x70] sm:$0xff]
        %v427 = vld [vmem:[%s358 + $0x78] sm:$0xff]
        %v428 = vld [vmem:[%s358 + $0x80] sm:$0xff]
        %v429 = vld [vmem:[%s358 + $0x88] sm:$0xff]
        %v430 = vld [vmem:[%s358 + $0x90] sm:$0xff]
        %v431 = vld [vmem:[%s358 + $0x98] sm:$0xff]
        %v432 = vld [vmem:[%s358 + $0xa0] sm:$0xff]
        %v433 = vld [vmem:[%s358 + $0xa8] sm:$0xff]
        %v434 = vld [vmem:[%s358 + $0xb0] sm:$0xff]
        %v435 = vld [vmem:[%s358 + $0xb8] sm:$0xff]
        %v436 = vld [vmem:[%s358 + $0xc0] sm:$0xff]
        %v437 = vld [vmem:[%s358 + $0xc8] sm:$0xff]
        %v438 = vld [vmem:[%s358 + $0xd0] sm:$0xff]
        %v439 = vld [vmem:[%s358 + $0xd8] sm:$0xff]
        %v440 = vld [vmem:[%s358 + $0xe0] sm:$0xff]
        %v441 = vld [vmem:[%s358 + $0xe8] sm:$0xff]
        %v442 = vld [vmem:[%s358 + $0xf0] sm:$0xff]
        %v443 = vld [vmem:[%s358 + $0xf8] sm:$0xff]
        %v444 = vpack.c.bf16 %v413, %v412
        %v445 = vpack.c.bf16 %v415, %v414
        %v446 = vpack.c.bf16 %v417, %v416
        %v447 = vpack.c.bf16 %v419, %v418
        %v448 = vpack.c.bf16 %v421, %v420
        %v449 = vpack.c.bf16 %v423, %v422
        %v450 = vpack.c.bf16 %v425, %v424
        %v451 = vpack.c.bf16 %v427, %v426
        %v452 = vpack.c.bf16 %v429, %v428
        %v453 = vpack.c.bf16 %v431, %v430
        %v454 = vpack.c.bf16 %v433, %v432
        %v455 = vpack.c.bf16 %v435, %v434
        %v456 = vpack.c.bf16 %v437, %v436
        %v457 = vpack.c.bf16 %v439, %v438
        %v458 = vpack.c.bf16 %v441, %v440
        %v459 = vpack.c.bf16 %v443, %v442
        %v460 = vld [vmem:[#allocation5] sm:$0xf]
        %v461 = vld [vmem:[#allocation5 + $0x4] sm:$0xf]
        %v462 = vld [vmem:[#allocation5 + $0x8] sm:$0xf]
        %v463 = vld [vmem:[#allocation5 + $0xc] sm:$0xf]
        %v464 = vld [vmem:[#allocation5 + $0x10] sm:$0xf]
        %v465 = vld [vmem:[#allocation5 + $0x14] sm:$0xf]
        %v466 = vld [vmem:[#allocation5 + $0x18] sm:$0xf]
        %v467 = vld [vmem:[#allocation5 + $0x1c] sm:$0xf]
        %v468 = vld [vmem:[#allocation5 + $0x20] sm:$0xf]
        %v469 = vld [vmem:[#allocation5 + $0x24] sm:$0xf]
        %v470 = vld [vmem:[#allocation5 + $0x28] sm:$0xf]
        %v471 = vld [vmem:[#allocation5 + $0x2c] sm:$0xf]
        %v472 = vld [vmem:[#allocation5 + $0x30] sm:$0xf]
        %v473 = vld [vmem:[#allocation5 + $0x34] sm:$0xf]
        %v474 = vld [vmem:[#allocation5 + $0x38] sm:$0xf]
        %v475 = vld [vmem:[#allocation5 + $0x3c] sm:$0xf]
        %v476 = vld [vmem:[%s2] sm:$0x1]
        %v478 = vlaneseq
        %v479 = vshrl.u32 %v478, 7
        %v480 = vsub.s32 0, %v479
        %v481 = vrot.slane %v476, %v480
        %v499 = vunpack.c.l.b16 %v460
        %v500 = vunpack.c.l.b16 %v461
        %v501 = vunpack.c.l.b16 %v462
        %v502 = vunpack.c.l.b16 %v463
        %v503 = vunpack.c.l.b16 %v464
        %v504 = vunpack.c.l.b16 %v465
        %v505 = vunpack.c.l.b16 %v466
        %v506 = vunpack.c.l.b16 %v467
        %v507 = vunpack.c.l.b16 %v468
        %v508 = vunpack.c.l.b16 %v469
        %v509 = vunpack.c.l.b16 %v470
        %v510 = vunpack.c.l.b16 %v471
        %v511 = vunpack.c.l.b16 %v472
        %v512 = vunpack.c.l.b16 %v473
        %v513 = vunpack.c.l.b16 %v474
        %v514 = vunpack.c.l.b16 %v475
        %v515 = vpack.c.b16 %v500, %v499
        %v516 = vpack.c.b16 %v502, %v501
        %v517 = vpack.c.b16 %v504, %v503
        %v518 = vpack.c.b16 %v506, %v505
        %v519 = vpack.c.b16 %v508, %v507
        %v520 = vpack.c.b16 %v510, %v509
        %v521 = vpack.c.b16 %v512, %v511
        %v522 = vpack.c.b16 %v514, %v513
        %531 = vmatprep.subr.bf16.mxu0 0
        %532 = vmatpush1.bf16.msra.mxu0 %v522
        %533 = vmatprep.subr.bf16.mxu0 0
        %534 = vmatpush1.bf16.msra.mxu0 %v521
        %535 = vmatprep.subr.bf16.mxu0 0
        %536 = vmatpush1.bf16.msra.mxu0 %v520
        %537 = vmatprep.subr.bf16.mxu0 0
        %538 = vmatpush1.bf16.msra.mxu0 %v519
        %539 = vmatprep.subr.bf16.mxu0 0
        %540 = vmatpush1.bf16.msra.mxu0 %v518
        %541 = vmatprep.subr.bf16.mxu0 0
        %542 = vmatpush1.bf16.msra.mxu0 %v517
        %543 = vmatprep.subr.bf16.mxu0 0
        %544 = vmatpush1.bf16.msra.mxu0 %v516
        %545 = vmatprep.subr.bf16.mxu0 0
        %546 = vmatpush1.bf16.msra.mxu0 %v515
        %547 = vmatprep.subr.bf16.mxu0 0
        %548 = vmatpush2.bf16.msra.mxu0 0
        %549 = vmatprep.subr.bf16.mxu0 0
        %550 = vmatpush2.bf16.msra.mxu0 0
        %551 = vmatprep.subr.bf16.mxu0 0
        %552 = vmatpush2.bf16.msra.mxu0 0
        %553 = vmatprep.subr.bf16.mxu0 0
        %554 = vmatpush2.bf16.msra.mxu0 0
        %555 = vmatprep.subr.bf16.mxu0 0
        %556 = vmatpush2.bf16.msra.mxu0 0
        %557 = vmatprep.subr.bf16.mxu0 0
        %558 = vmatpush2.bf16.msra.mxu0 0
        %559 = vmatprep.subr.bf16.mxu0 0
        %560 = vmatpush2.bf16.msra.mxu0 0
        %561 = vmatprep.subr.bf16.mxu0 0
        %562 = vmatpush2.bf16.msra.mxu0 0
        %563 = vmatprep.mubr.bf16.mxu0 0
        %564 = vmatmul.mubr.bf16.gmra.mxu0 %v444
        %v565 = vpop.f32.mrf.mxu0
        %v566 = vadd.f32 %v481, %v565
        %v567 = vpop.f32.mrf.mxu0
        %v568 = vpop.f32.mrf.mxu0
        %v569 = vadd.f32 %v481, %v568
        %v570 = vpop.f32.mrf.mxu0
        %571 = vmatprep.mubr.bf16.mxu0 0
        %572 = vmatmul.mubr.bf16.gmra.mxu0 %v445
        %v573 = vpop.f32.mrf.mxu0
        %v574 = vadd.f32 %v481, %v573
        %v575 = vpop.f32.mrf.mxu0
        %v576 = vpop.f32.mrf.mxu0
        %v577 = vadd.f32 %v481, %v576
        %v578 = vpop.f32.mrf.mxu0
        %579 = vmatprep.mubr.bf16.mxu0 0
        %580 = vmatmul.mubr.bf16.gmra.mxu0 %v446
        %v581 = vpop.f32.mrf.mxu0
        %v582 = vadd.f32 %v481, %v581
        %v583 = vpop.f32.mrf.mxu0
        %v584 = vpop.f32.mrf.mxu0
        %v585 = vadd.f32 %v481, %v584
        %v586 = vpop.f32.mrf.mxu0
        %587 = vmatprep.mubr.bf16.mxu0 0
        %588 = vmatmul.mubr.bf16.gmra.mxu0 %v447
        %v589 = vpop.f32.mrf.mxu0
        %v590 = vadd.f32 %v481, %v589
        %v591 = vpop.f32.mrf.mxu0
        %v592 = vpop.f32.mrf.mxu0
        %v593 = vadd.f32 %v481, %v592
        %v594 = vpop.f32.mrf.mxu0
        %595 = vmatprep.mubr.bf16.mxu0 0
        %596 = vmatmul.mubr.bf16.gmra.mxu0 %v448
        %v597 = vpop.f32.mrf.mxu0
        %v598 = vadd.f32 %v481, %v597
        %v599 = vpop.f32.mrf.mxu0
        %v600 = vpop.f32.mrf.mxu0
        %v601 = vadd.f32 %v481, %v600
        %v602 = vpop.f32.mrf.mxu0
        %603 = vmatprep.mubr.bf16.mxu0 0
        %604 = vmatmul.mubr.bf16.gmra.mxu0 %v449
        %v605 = vpop.f32.mrf.mxu0
        %v606 = vadd.f32 %v481, %v605
        %v607 = vpop.f32.mrf.mxu0
        %v608 = vpop.f32.mrf.mxu0
        %v609 = vadd.f32 %v481, %v608
        %v610 = vpop.f32.mrf.mxu0
        %611 = vmatprep.mubr.bf16.mxu0 0
        %612 = vmatmul.mubr.bf16.gmra.mxu0 %v450
        %v613 = vpop.f32.mrf.mxu0
        %v614 = vadd.f32 %v481, %v613
        %v615 = vpop.f32.mrf.mxu0
        %v616 = vpop.f32.mrf.mxu0
        %v617 = vadd.f32 %v481, %v616
        %v618 = vpop.f32.mrf.mxu0
        %619 = vmatprep.mubr.bf16.mxu0 0
        %620 = vmatmul.mubr.bf16.gmra.mxu0 %v451
        %v621 = vpop.f32.mrf.mxu0
        %v622 = vadd.f32 %v481, %v621
        %v623 = vpop.f32.mrf.mxu0
        %v624 = vpop.f32.mrf.mxu0
        %v625 = vadd.f32 %v481, %v624
        %v626 = vpop.f32.mrf.mxu0
        %627 = vmatprep.mubr.bf16.mxu0 0
        %628 = vmatmul.mubr.bf16.gmra.mxu0 %v452
        %v629 = vpop.f32.mrf.mxu0
        %v630 = vadd.f32 %v481, %v629
        %v631 = vpop.f32.mrf.mxu0
        %v632 = vpop.f32.mrf.mxu0
        %v633 = vadd.f32 %v481, %v632
        %v634 = vpop.f32.mrf.mxu0
        %635 = vmatprep.mubr.bf16.mxu0 0
        %636 = vmatmul.mubr.bf16.gmra.mxu0 %v453
        %v637 = vpop.f32.mrf.mxu0
        %v638 = vadd.f32 %v481, %v637
        %v639 = vpop.f32.mrf.mxu0
        %v640 = vpop.f32.mrf.mxu0
        %v641 = vadd.f32 %v481, %v640
        %v642 = vpop.f32.mrf.mxu0
        %643 = vmatprep.mubr.bf16.mxu0 0
        %644 = vmatmul.mubr.bf16.gmra.mxu0 %v454
        %v645 = vpop.f32.mrf.mxu0
        %v646 = vadd.f32 %v481, %v645
        %v647 = vpop.f32.mrf.mxu0
        %v648 = vpop.f32.mrf.mxu0
        %v649 = vadd.f32 %v481, %v648
        %v650 = vpop.f32.mrf.mxu0
        %651 = vmatprep.mubr.bf16.mxu0 0
        %652 = vmatmul.mubr.bf16.gmra.mxu0 %v455
        %v653 = vpop.f32.mrf.mxu0
        %v654 = vadd.f32 %v481, %v653
        %v655 = vpop.f32.mrf.mxu0
        %v656 = vpop.f32.mrf.mxu0
        %v657 = vadd.f32 %v481, %v656
        %v658 = vpop.f32.mrf.mxu0
        %659 = vmatprep.mubr.bf16.mxu0 0
        %660 = vmatmul.mubr.bf16.gmra.mxu0 %v456
        %v661 = vpop.f32.mrf.mxu0
        %v662 = vadd.f32 %v481, %v661
        %v663 = vpop.f32.mrf.mxu0
        %v664 = vpop.f32.mrf.mxu0
        %v665 = vadd.f32 %v481, %v664
        %v666 = vpop.f32.mrf.mxu0
        %667 = vmatprep.mubr.bf16.mxu0 0
        %668 = vmatmul.mubr.bf16.gmra.mxu0 %v457
        %v669 = vpop.f32.mrf.mxu0
        %v670 = vadd.f32 %v481, %v669
        %v671 = vpop.f32.mrf.mxu0
        %v672 = vpop.f32.mrf.mxu0
        %v673 = vadd.f32 %v481, %v672
        %v674 = vpop.f32.mrf.mxu0
        %675 = vmatprep.mubr.bf16.mxu0 0
        %676 = vmatmul.mubr.bf16.gmra.mxu0 %v458
        %v677 = vpop.f32.mrf.mxu0
        %v678 = vadd.f32 %v481, %v677
        %v679 = vpop.f32.mrf.mxu0
        %v680 = vpop.f32.mrf.mxu0
        %v681 = vadd.f32 %v481, %v680
        %v682 = vpop.f32.mrf.mxu0
        %683 = vmatprep.mubr.bf16.mxu0 0
        %684 = vmatmul.mubr.bf16.gmra.mxu0 %v459
        %v685 = vpop.f32.mrf.mxu0
        %v686 = vadd.f32 %v481, %v685
        %v687 = vpop.f32.mrf.mxu0
        %v688 = vpop.f32.mrf.mxu0
        %v689 = vadd.f32 %v481, %v688
        %v690 = vpop.f32.mrf.mxu0
        %691 = vdwg.mxu0
        %v692 = vmax.f32 %v566, 0.0
        %v693 = vmax.f32 %v569, 0.0
        %v694 = vmax.f32 %v574, 0.0
        %v695 = vmax.f32 %v577, 0.0
        %v696 = vmax.f32 %v582, 0.0
        %v697 = vmax.f32 %v585, 0.0
        %v698 = vmax.f32 %v590, 0.0
        %v699 = vmax.f32 %v593, 0.0
        %v700 = vmax.f32 %v598, 0.0
        %v701 = vmax.f32 %v601, 0.0
        %v702 = vmax.f32 %v606, 0.0
        %v703 = vmax.f32 %v609, 0.0
        %v704 = vmax.f32 %v614, 0.0
        %v705 = vmax.f32 %v617, 0.0
        %v706 = vmax.f32 %v622, 0.0
        %v707 = vmax.f32 %v625, 0.0
        %v708 = vmax.f32 %v630, 0.0
        %v709 = vmax.f32 %v633, 0.0
        %v710 = vmax.f32 %v638, 0.0
        %v711 = vmax.f32 %v641, 0.0
        %v712 = vmax.f32 %v646, 0.0
        %v713 = vmax.f32 %v649, 0.0
        %v714 = vmax.f32 %v654, 0.0
        %v715 = vmax.f32 %v657, 0.0
        %v716 = vmax.f32 %v662, 0.0
        %v717 = vmax.f32 %v665, 0.0
        %v718 = vmax.f32 %v670, 0.0
        %v719 = vmax.f32 %v673, 0.0
        %v720 = vmax.f32 %v678, 0.0
        %v721 = vmax.f32 %v681, 0.0
        %v722 = vmax.f32 %v686, 0.0
        %v723 = vmax.f32 %v689, 0.0
        %v724 = vpack.c.bf16 %v693, %v692
        %v725 = vpack.c.bf16 %v695, %v694
        %v726 = vpack.c.bf16 %v697, %v696
        %v727 = vpack.c.bf16 %v699, %v698
        %v728 = vpack.c.bf16 %v701, %v700
        %v729 = vpack.c.bf16 %v703, %v702
        %v730 = vpack.c.bf16 %v705, %v704
        %v731 = vpack.c.bf16 %v707, %v706
        %v732 = vpack.c.bf16 %v709, %v708
        %v733 = vpack.c.bf16 %v711, %v710
        %v734 = vpack.c.bf16 %v713, %v712
        %v735 = vpack.c.bf16 %v715, %v714
        %v736 = vpack.c.bf16 %v717, %v716
        %v737 = vpack.c.bf16 %v719, %v718
        %v738 = vpack.c.bf16 %v721, %v720
        %v739 = vpack.c.bf16 %v723, %v722
        %v740 = vld [vmem:[#allocation7] sm:$0xf]
        %v741 = vld [vmem:[#allocation7 + $0x4] sm:$0xf]
        %v742 = vld [vmem:[#allocation7 + $0x8] sm:$0xf]
        %v743 = vld [vmem:[#allocation7 + $0xc] sm:$0xf]
        %v744 = vld [vmem:[#allocation7 + $0x10] sm:$0xf]
        %v745 = vld [vmem:[#allocation7 + $0x14] sm:$0xf]
        %v746 = vld [vmem:[#allocation7 + $0x18] sm:$0xf]
        %v747 = vld [vmem:[#allocation7 + $0x1c] sm:$0xf]
        %v748 = vld [vmem:[#allocation7 + $0x20] sm:$0xf]
        %v749 = vld [vmem:[#allocation7 + $0x24] sm:$0xf]
        %v750 = vld [vmem:[#allocation7 + $0x28] sm:$0xf]
        %v751 = vld [vmem:[#allocation7 + $0x2c] sm:$0xf]
        %v752 = vld [vmem:[#allocation7 + $0x30] sm:$0xf]
        %v753 = vld [vmem:[#allocation7 + $0x34] sm:$0xf]
        %v754 = vld [vmem:[#allocation7 + $0x38] sm:$0xf]
        %v755 = vld [vmem:[#allocation7 + $0x3c] sm:$0xf]
        %v756 = vld [vmem:[%s4] sm:$0x1]
        %v758 = vlaneseq
        %v759 = vshrl.u32 %v758, 7
        %v760 = vsub.s32 0, %v759
        %v761 = vrot.slane %v756, %v760
        %v779 = vunpack.c.l.b16 %v740
        %v780 = vunpack.c.l.b16 %v741
        %v781 = vunpack.c.l.b16 %v742
        %v782 = vunpack.c.l.b16 %v743
        %v783 = vunpack.c.l.b16 %v744
        %v784 = vunpack.c.l.b16 %v745
        %v785 = vunpack.c.l.b16 %v746
        %v786 = vunpack.c.l.b16 %v747
        %v787 = vunpack.c.l.b16 %v748
        %v788 = vunpack.c.l.b16 %v749
        %v789 = vunpack.c.l.b16 %v750
        %v790 = vunpack.c.l.b16 %v751
        %v791 = vunpack.c.l.b16 %v752
        %v792 = vunpack.c.l.b16 %v753
        %v793 = vunpack.c.l.b16 %v754
        %v794 = vunpack.c.l.b16 %v755
        %v795 = vpack.c.b16 %v780, %v779
        %v796 = vpack.c.b16 %v782, %v781
        %v797 = vpack.c.b16 %v784, %v783
        %v798 = vpack.c.b16 %v786, %v785
        %v799 = vpack.c.b16 %v788, %v787
        %v800 = vpack.c.b16 %v790, %v789
        %v801 = vpack.c.b16 %v792, %v791
        %v802 = vpack.c.b16 %v794, %v793
        %811 = vmatprep.subr.bf16.mxu0 0
        %812 = vmatpush1.bf16.msra.mxu0 %v802
        %813 = vmatprep.subr.bf16.mxu0 0
        %814 = vmatpush1.bf16.msra.mxu0 %v801
        %815 = vmatprep.subr.bf16.mxu0 0
        %816 = vmatpush1.bf16.msra.mxu0 %v800
        %817 = vmatprep.subr.bf16.mxu0 0
        %818 = vmatpush1.bf16.msra.mxu0 %v799
        %819 = vmatprep.subr.bf16.mxu0 0
        %820 = vmatpush1.bf16.msra.mxu0 %v798
        %821 = vmatprep.subr.bf16.mxu0 0
        %822 = vmatpush1.bf16.msra.mxu0 %v797
        %823 = vmatprep.subr.bf16.mxu0 0
        %824 = vmatpush1.bf16.msra.mxu0 %v796
        %825 = vmatprep.subr.bf16.mxu0 0
        %826 = vmatpush1.bf16.msra.mxu0 %v795
        %827 = vmatprep.subr.bf16.mxu0 0
        %828 = vmatpush2.bf16.msra.mxu0 0
        %829 = vmatprep.subr.bf16.mxu0 0
        %830 = vmatpush2.bf16.msra.mxu0 0
        %831 = vmatprep.subr.bf16.mxu0 0
        %832 = vmatpush2.bf16.msra.mxu0 0
        %833 = vmatprep.subr.bf16.mxu0 0
        %834 = vmatpush2.bf16.msra.mxu0 0
        %835 = vmatprep.subr.bf16.mxu0 0
        %836 = vmatpush2.bf16.msra.mxu0 0
        %837 = vmatprep.subr.bf16.mxu0 0
        %838 = vmatpush2.bf16.msra.mxu0 0
        %839 = vmatprep.subr.bf16.mxu0 0
        %840 = vmatpush2.bf16.msra.mxu0 0
        %841 = vmatprep.subr.bf16.mxu0 0
        %842 = vmatpush2.bf16.msra.mxu0 0
        %843 = vmatprep.mubr.bf16.mxu0 0
        %844 = vmatmul.mubr.bf16.gmra.mxu0 %v724
        %v845 = vpop.f32.mrf.mxu0
        %v846 = vadd.f32 %v761, %v845
        %v847 = vpop.f32.mrf.mxu0
        %v848 = vpop.f32.mrf.mxu0
        %v849 = vadd.f32 %v761, %v848
        %v850 = vpop.f32.mrf.mxu0
        %851 = vmatprep.mubr.bf16.mxu0 0
        %852 = vmatmul.mubr.bf16.gmra.mxu0 %v725
        %v853 = vpop.f32.mrf.mxu0
        %v854 = vadd.f32 %v761, %v853
        %v855 = vpop.f32.mrf.mxu0
        %v856 = vpop.f32.mrf.mxu0
        %v857 = vadd.f32 %v761, %v856
        %v858 = vpop.f32.mrf.mxu0
        %859 = vmatprep.mubr.bf16.mxu0 0
        %860 = vmatmul.mubr.bf16.gmra.mxu0 %v726
        %v861 = vpop.f32.mrf.mxu0
        %v862 = vadd.f32 %v761, %v861
        %v863 = vpop.f32.mrf.mxu0
        %v864 = vpop.f32.mrf.mxu0
        %v865 = vadd.f32 %v761, %v864
        %v866 = vpop.f32.mrf.mxu0
        %867 = vmatprep.mubr.bf16.mxu0 0
        %868 = vmatmul.mubr.bf16.gmra.mxu0 %v727
        %v869 = vpop.f32.mrf.mxu0
        %v870 = vadd.f32 %v761, %v869
        %v871 = vpop.f32.mrf.mxu0
        %v872 = vpop.f32.mrf.mxu0
        %v873 = vadd.f32 %v761, %v872
        %v874 = vpop.f32.mrf.mxu0
        %875 = vmatprep.mubr.bf16.mxu0 0
        %876 = vmatmul.mubr.bf16.gmra.mxu0 %v728
        %v877 = vpop.f32.mrf.mxu0
        %v878 = vadd.f32 %v761, %v877
        %v879 = vpop.f32.mrf.mxu0
        %v880 = vpop.f32.mrf.mxu0
        %v881 = vadd.f32 %v761, %v880
        %v882 = vpop.f32.mrf.mxu0
        %883 = vmatprep.mubr.bf16.mxu0 0
        %884 = vmatmul.mubr.bf16.gmra.mxu0 %v729
        %v885 = vpop.f32.mrf.mxu0
        %v886 = vadd.f32 %v761, %v885
        %v887 = vpop.f32.mrf.mxu0
        %v888 = vpop.f32.mrf.mxu0
        %v889 = vadd.f32 %v761, %v888
        %v890 = vpop.f32.mrf.mxu0
        %891 = vmatprep.mubr.bf16.mxu0 0
        %892 = vmatmul.mubr.bf16.gmra.mxu0 %v730
        %v893 = vpop.f32.mrf.mxu0
        %v894 = vadd.f32 %v761, %v893
        %v895 = vpop.f32.mrf.mxu0
        %v896 = vpop.f32.mrf.mxu0
        %v897 = vadd.f32 %v761, %v896
        %v898 = vpop.f32.mrf.mxu0
        %899 = vmatprep.mubr.bf16.mxu0 0
        %900 = vmatmul.mubr.bf16.gmra.mxu0 %v731
        %v901 = vpop.f32.mrf.mxu0
        %v902 = vadd.f32 %v761, %v901
        %v903 = vpop.f32.mrf.mxu0
        %v904 = vpop.f32.mrf.mxu0
        %v905 = vadd.f32 %v761, %v904
        %v906 = vpop.f32.mrf.mxu0
        %907 = vmatprep.mubr.bf16.mxu0 0
        %908 = vmatmul.mubr.bf16.gmra.mxu0 %v732
        %v909 = vpop.f32.mrf.mxu0
        %v910 = vadd.f32 %v761, %v909
        %v911 = vpop.f32.mrf.mxu0
        %v912 = vpop.f32.mrf.mxu0
        %v913 = vadd.f32 %v761, %v912
        %v914 = vpop.f32.mrf.mxu0
        %915 = vmatprep.mubr.bf16.mxu0 0
        %916 = vmatmul.mubr.bf16.gmra.mxu0 %v733
        %v917 = vpop.f32.mrf.mxu0
        %v918 = vadd.f32 %v761, %v917
        %v919 = vpop.f32.mrf.mxu0
        %v920 = vpop.f32.mrf.mxu0
        %v921 = vadd.f32 %v761, %v920
        %v922 = vpop.f32.mrf.mxu0
        %923 = vmatprep.mubr.bf16.mxu0 0
        %924 = vmatmul.mubr.bf16.gmra.mxu0 %v734
        %v925 = vpop.f32.mrf.mxu0
        %v926 = vadd.f32 %v761, %v925
        %v927 = vpop.f32.mrf.mxu0
        %v928 = vpop.f32.mrf.mxu0
        %v929 = vadd.f32 %v761, %v928
        %v930 = vpop.f32.mrf.mxu0
        %931 = vmatprep.mubr.bf16.mxu0 0
        %932 = vmatmul.mubr.bf16.gmra.mxu0 %v735
        %v933 = vpop.f32.mrf.mxu0
        %v934 = vadd.f32 %v761, %v933
        %v935 = vpop.f32.mrf.mxu0
        %v936 = vpop.f32.mrf.mxu0
        %v937 = vadd.f32 %v761, %v936
        %v938 = vpop.f32.mrf.mxu0
        %939 = vmatprep.mubr.bf16.mxu0 0
        %940 = vmatmul.mubr.bf16.gmra.mxu0 %v736
        %v941 = vpop.f32.mrf.mxu0
        %v942 = vadd.f32 %v761, %v941
        %v943 = vpop.f32.mrf.mxu0
        %v944 = vpop.f32.mrf.mxu0
        %v945 = vadd.f32 %v761, %v944
        %v946 = vpop.f32.mrf.mxu0
        %947 = vmatprep.mubr.bf16.mxu0 0
        %948 = vmatmul.mubr.bf16.gmra.mxu0 %v737
        %v949 = vpop.f32.mrf.mxu0
        %v950 = vadd.f32 %v761, %v949
        %v951 = vpop.f32.mrf.mxu0
        %v952 = vpop.f32.mrf.mxu0
        %v953 = vadd.f32 %v761, %v952
        %v954 = vpop.f32.mrf.mxu0
        %955 = vmatprep.mubr.bf16.mxu0 0
        %956 = vmatmul.mubr.bf16.gmra.mxu0 %v738
        %v957 = vpop.f32.mrf.mxu0
        %v958 = vadd.f32 %v761, %v957
        %v959 = vpop.f32.mrf.mxu0
        %v960 = vpop.f32.mrf.mxu0
        %v961 = vadd.f32 %v761, %v960
        %v962 = vpop.f32.mrf.mxu0
        %963 = vmatprep.mubr.bf16.mxu0 0
        %964 = vmatmul.mubr.bf16.gmra.mxu0 %v739
        %v965 = vpop.f32.mrf.mxu0
        %v966 = vadd.f32 %v761, %v965
        %v967 = vpop.f32.mrf.mxu0
        %v968 = vpop.f32.mrf.mxu0
        %v969 = vadd.f32 %v761, %v968
        %v970 = vpop.f32.mrf.mxu0
        %971 = vdwg.mxu0
        %v972 = vmax.f32 %v846, 0.0
        %v973 = vmax.f32 %v849, 0.0
        %v974 = vmax.f32 %v854, 0.0
        %v975 = vmax.f32 %v857, 0.0
        %v976 = vmax.f32 %v862, 0.0
        %v977 = vmax.f32 %v865, 0.0
        %v978 = vmax.f32 %v870, 0.0
        %v979 = vmax.f32 %v873, 0.0
        %v980 = vmax.f32 %v878, 0.0
        %v981 = vmax.f32 %v881, 0.0
        %v982 = vmax.f32 %v886, 0.0
        %v983 = vmax.f32 %v889, 0.0
        %v984 = vmax.f32 %v894, 0.0
        %v985 = vmax.f32 %v897, 0.0
        %v986 = vmax.f32 %v902, 0.0
        %v987 = vmax.f32 %v905, 0.0
        %v988 = vmax.f32 %v910, 0.0
        %v989 = vmax.f32 %v913, 0.0
        %v990 = vmax.f32 %v918, 0.0
        %v991 = vmax.f32 %v921, 0.0
        %v992 = vmax.f32 %v926, 0.0
        %v993 = vmax.f32 %v929, 0.0
        %v994 = vmax.f32 %v934, 0.0
        %v995 = vmax.f32 %v937, 0.0
        %v996 = vmax.f32 %v942, 0.0
        %v997 = vmax.f32 %v945, 0.0
        %v998 = vmax.f32 %v950, 0.0
        %v999 = vmax.f32 %v953, 0.0
        %v1000 = vmax.f32 %v958, 0.0
        %v1001 = vmax.f32 %v961, 0.0
        %v1002 = vmax.f32 %v966, 0.0
        %v1003 = vmax.f32 %v969, 0.0
        %v1004 = vpack.c.bf16 %v973, %v972
        %v1005 = vpack.c.bf16 %v975, %v974
        %v1006 = vpack.c.bf16 %v977, %v976
        %v1007 = vpack.c.bf16 %v979, %v978
        %v1008 = vpack.c.bf16 %v981, %v980
        %v1009 = vpack.c.bf16 %v983, %v982
        %v1010 = vpack.c.bf16 %v985, %v984
        %v1011 = vpack.c.bf16 %v987, %v986
        %v1012 = vpack.c.bf16 %v989, %v988
        %v1013 = vpack.c.bf16 %v991, %v990
        %v1014 = vpack.c.bf16 %v993, %v992
        %v1015 = vpack.c.bf16 %v995, %v994
        %v1016 = vpack.c.bf16 %v997, %v996
        %v1017 = vpack.c.bf16 %v999, %v998
        %v1018 = vpack.c.bf16 %v1001, %v1000
        %v1019 = vpack.c.bf16 %v1003, %v1002
        %v1020 = vld [vmem:[#allocation8] sm:$0xf]
        %v1021 = vld [vmem:[#allocation8 + $0x4] sm:$0xf]
        %v1022 = vld [vmem:[#allocation8 + $0x8] sm:$0xf]
        %v1023 = vld [vmem:[#allocation8 + $0xc] sm:$0xf]
        %v1024 = vld [vmem:[#allocation8 + $0x10] sm:$0xf]
        %v1025 = vld [vmem:[#allocation8 + $0x14] sm:$0xf]
        %v1026 = vld [vmem:[#allocation8 + $0x18] sm:$0xf]
        %v1027 = vld [vmem:[#allocation8 + $0x1c] sm:$0xf]
        %v1028 = vld [vmem:[#allocation8 + $0x20] sm:$0xf]
        %v1029 = vld [vmem:[#allocation8 + $0x24] sm:$0xf]
        %v1030 = vld [vmem:[#allocation8 + $0x28] sm:$0xf]
        %v1031 = vld [vmem:[#allocation8 + $0x2c] sm:$0xf]
        %v1032 = vld [vmem:[#allocation8 + $0x30] sm:$0xf]
        %v1033 = vld [vmem:[#allocation8 + $0x34] sm:$0xf]
        %v1034 = vld [vmem:[#allocation8 + $0x38] sm:$0xf]
        %v1035 = vld [vmem:[#allocation8 + $0x3c] sm:$0xf]
        %v1036 = vld [vmem:[%s6] sm:$0x1]
        %v1038 = vlaneseq
        %v1039 = vshrl.u32 %v1038, 7
        %v1040 = vsub.s32 0, %v1039
        %v1041 = vrot.slane %v1036, %v1040
        %v1059 = vunpack.c.l.b16 %v1020
        %v1060 = vunpack.c.l.b16 %v1021
        %v1061 = vunpack.c.l.b16 %v1022
        %v1062 = vunpack.c.l.b16 %v1023
        %v1063 = vunpack.c.l.b16 %v1024
        %v1064 = vunpack.c.l.b16 %v1025
        %v1065 = vunpack.c.l.b16 %v1026
        %v1066 = vunpack.c.l.b16 %v1027
        %v1067 = vunpack.c.l.b16 %v1028
        %v1068 = vunpack.c.l.b16 %v1029
        %v1069 = vunpack.c.l.b16 %v1030
        %v1070 = vunpack.c.l.b16 %v1031
        %v1071 = vunpack.c.l.b16 %v1032
        %v1072 = vunpack.c.l.b16 %v1033
        %v1073 = vunpack.c.l.b16 %v1034
        %v1074 = vunpack.c.l.b16 %v1035
        %v1075 = vpack.c.b16 %v1060, %v1059
        %v1076 = vpack.c.b16 %v1062, %v1061
        %v1077 = vpack.c.b16 %v1064, %v1063
        %v1078 = vpack.c.b16 %v1066, %v1065
        %v1079 = vpack.c.b16 %v1068, %v1067
        %v1080 = vpack.c.b16 %v1070, %v1069
        %v1081 = vpack.c.b16 %v1072, %v1071
        %v1082 = vpack.c.b16 %v1074, %v1073
        %1091 = vmatprep.subr.bf16.mxu0 0
        %1092 = vmatpush1.bf16.msra.mxu0 %v1082
        %1093 = vmatprep.subr.bf16.mxu0 0
        %1094 = vmatpush1.bf16.msra.mxu0 %v1081
        %1095 = vmatprep.subr.bf16.mxu0 0
        %1096 = vmatpush1.bf16.msra.mxu0 %v1080
        %1097 = vmatprep.subr.bf16.mxu0 0
        %1098 = vmatpush1.bf16.msra.mxu0 %v1079
        %1099 = vmatprep.subr.bf16.mxu0 0
        %1100 = vmatpush1.bf16.msra.mxu0 %v1078
        %1101 = vmatprep.subr.bf16.mxu0 0
        %1102 = vmatpush1.bf16.msra.mxu0 %v1077
        %1103 = vmatprep.subr.bf16.mxu0 0
        %1104 = vmatpush1.bf16.msra.mxu0 %v1076
        %1105 = vmatprep.subr.bf16.mxu0 0
        %1106 = vmatpush1.bf16.msra.mxu0 %v1075
        %1107 = vmatprep.subr.bf16.mxu0 0
        %1108 = vmatpush2.bf16.msra.mxu0 0
        %1109 = vmatprep.subr.bf16.mxu0 0
        %1110 = vmatpush2.bf16.msra.mxu0 0
        %1111 = vmatprep.subr.bf16.mxu0 0
        %1112 = vmatpush2.bf16.msra.mxu0 0
        %1113 = vmatprep.subr.bf16.mxu0 0
        %1114 = vmatpush2.bf16.msra.mxu0 0
        %1115 = vmatprep.subr.bf16.mxu0 0
        %1116 = vmatpush2.bf16.msra.mxu0 0
        %1117 = vmatprep.subr.bf16.mxu0 0
        %1118 = vmatpush2.bf16.msra.mxu0 0
        %1119 = vmatprep.subr.bf16.mxu0 0
        %1120 = vmatpush2.bf16.msra.mxu0 0
        %1121 = vmatprep.subr.bf16.mxu0 0
        %1122 = vmatpush2.bf16.msra.mxu0 0
        %1123 = vmatprep.mubr.bf16.mxu0 0
        %1124 = vmatmul.mubr.bf16.gmra.mxu0 %v1004
        %v1125 = vpop.f32.mrf.mxu0
        %v1126 = vadd.f32 %v1041, %v1125
        %v1127 = vpop.f32.mrf.mxu0
        %v1128 = vpop.f32.mrf.mxu0
        %v1129 = vadd.f32 %v1041, %v1128
        %v1130 = vpop.f32.mrf.mxu0
        %1131 = vmatprep.mubr.bf16.mxu0 0
        %1132 = vmatmul.mubr.bf16.gmra.mxu0 %v1005
        %v1133 = vpop.f32.mrf.mxu0
        %v1134 = vadd.f32 %v1041, %v1133
        %v1135 = vpop.f32.mrf.mxu0
        %v1136 = vpop.f32.mrf.mxu0
        %v1137 = vadd.f32 %v1041, %v1136
        %v1138 = vpop.f32.mrf.mxu0
        %1139 = vmatprep.mubr.bf16.mxu0 0
        %1140 = vmatmul.mubr.bf16.gmra.mxu0 %v1006
        %v1141 = vpop.f32.mrf.mxu0
        %v1142 = vadd.f32 %v1041, %v1141
        %v1143 = vpop.f32.mrf.mxu0
        %v1144 = vpop.f32.mrf.mxu0
        %v1145 = vadd.f32 %v1041, %v1144
        %v1146 = vpop.f32.mrf.mxu0
        %1147 = vmatprep.mubr.bf16.mxu0 0
        %1148 = vmatmul.mubr.bf16.gmra.mxu0 %v1007
        %v1149 = vpop.f32.mrf.mxu0
        %v1150 = vadd.f32 %v1041, %v1149
        %v1151 = vpop.f32.mrf.mxu0
        %v1152 = vpop.f32.mrf.mxu0
        %v1153 = vadd.f32 %v1041, %v1152
        %v1154 = vpop.f32.mrf.mxu0
        %1155 = vmatprep.mubr.bf16.mxu0 0
        %1156 = vmatmul.mubr.bf16.gmra.mxu0 %v1008
        %v1157 = vpop.f32.mrf.mxu0
        %v1158 = vadd.f32 %v1041, %v1157
        %v1159 = vpop.f32.mrf.mxu0
        %v1160 = vpop.f32.mrf.mxu0
        %v1161 = vadd.f32 %v1041, %v1160
        %v1162 = vpop.f32.mrf.mxu0
        %1163 = vmatprep.mubr.bf16.mxu0 0
        %1164 = vmatmul.mubr.bf16.gmra.mxu0 %v1009
        %v1165 = vpop.f32.mrf.mxu0
        %v1166 = vadd.f32 %v1041, %v1165
        %v1167 = vpop.f32.mrf.mxu0
        %v1168 = vpop.f32.mrf.mxu0
        %v1169 = vadd.f32 %v1041, %v1168
        %v1170 = vpop.f32.mrf.mxu0
        %1171 = vmatprep.mubr.bf16.mxu0 0
        %1172 = vmatmul.mubr.bf16.gmra.mxu0 %v1010
        %v1173 = vpop.f32.mrf.mxu0
        %v1174 = vadd.f32 %v1041, %v1173
        %v1175 = vpop.f32.mrf.mxu0
        %v1176 = vpop.f32.mrf.mxu0
        %v1177 = vadd.f32 %v1041, %v1176
        %v1178 = vpop.f32.mrf.mxu0
        %1179 = vmatprep.mubr.bf16.mxu0 0
        %1180 = vmatmul.mubr.bf16.gmra.mxu0 %v1011
        %v1181 = vpop.f32.mrf.mxu0
        %v1182 = vadd.f32 %v1041, %v1181
        %v1183 = vpop.f32.mrf.mxu0
        %v1184 = vpop.f32.mrf.mxu0
        %v1185 = vadd.f32 %v1041, %v1184
        %v1186 = vpop.f32.mrf.mxu0
        %1187 = vmatprep.mubr.bf16.mxu0 0
        %1188 = vmatmul.mubr.bf16.gmra.mxu0 %v1012
        %v1189 = vpop.f32.mrf.mxu0
        %v1190 = vadd.f32 %v1041, %v1189
        %v1191 = vpop.f32.mrf.mxu0
        %v1192 = vpop.f32.mrf.mxu0
        %v1193 = vadd.f32 %v1041, %v1192
        %v1194 = vpop.f32.mrf.mxu0
        %1195 = vmatprep.mubr.bf16.mxu0 0
        %1196 = vmatmul.mubr.bf16.gmra.mxu0 %v1013
        %v1197 = vpop.f32.mrf.mxu0
        %v1198 = vadd.f32 %v1041, %v1197
        %v1199 = vpop.f32.mrf.mxu0
        %v1200 = vpop.f32.mrf.mxu0
        %v1201 = vadd.f32 %v1041, %v1200
        %v1202 = vpop.f32.mrf.mxu0
        %1203 = vmatprep.mubr.bf16.mxu0 0
        %1204 = vmatmul.mubr.bf16.gmra.mxu0 %v1014
        %v1205 = vpop.f32.mrf.mxu0
        %v1206 = vadd.f32 %v1041, %v1205
        %v1207 = vpop.f32.mrf.mxu0
        %v1208 = vpop.f32.mrf.mxu0
        %v1209 = vadd.f32 %v1041, %v1208
        %v1210 = vpop.f32.mrf.mxu0
        %1211 = vmatprep.mubr.bf16.mxu0 0
        %1212 = vmatmul.mubr.bf16.gmra.mxu0 %v1015
        %v1213 = vpop.f32.mrf.mxu0
        %v1214 = vadd.f32 %v1041, %v1213
        %v1215 = vpop.f32.mrf.mxu0
        %v1216 = vpop.f32.mrf.mxu0
        %v1217 = vadd.f32 %v1041, %v1216
        %v1218 = vpop.f32.mrf.mxu0
        %1219 = vmatprep.mubr.bf16.mxu0 0
        %1220 = vmatmul.mubr.bf16.gmra.mxu0 %v1016
        %v1221 = vpop.f32.mrf.mxu0
        %v1222 = vadd.f32 %v1041, %v1221
        %v1223 = vpop.f32.mrf.mxu0
        %v1224 = vpop.f32.mrf.mxu0
        %v1225 = vadd.f32 %v1041, %v1224
        %v1226 = vpop.f32.mrf.mxu0
        %1227 = vmatprep.mubr.bf16.mxu0 0
        %1228 = vmatmul.mubr.bf16.gmra.mxu0 %v1017
        %v1229 = vpop.f32.mrf.mxu0
        %v1230 = vadd.f32 %v1041, %v1229
        %v1231 = vpop.f32.mrf.mxu0
        %v1232 = vpop.f32.mrf.mxu0
        %v1233 = vadd.f32 %v1041, %v1232
        %v1234 = vpop.f32.mrf.mxu0
        %1235 = vmatprep.mubr.bf16.mxu0 0
        %1236 = vmatmul.mubr.bf16.gmra.mxu0 %v1018
        %v1237 = vpop.f32.mrf.mxu0
        %v1238 = vadd.f32 %v1041, %v1237
        %v1239 = vpop.f32.mrf.mxu0
        %v1240 = vpop.f32.mrf.mxu0
        %v1241 = vadd.f32 %v1041, %v1240
        %v1242 = vpop.f32.mrf.mxu0
        %1243 = vmatprep.mubr.bf16.mxu0 0
        %1244 = vmatmul.mubr.bf16.gmra.mxu0 %v1019
        %v1245 = vpop.f32.mrf.mxu0
        %v1246 = vadd.f32 %v1041, %v1245
        %v1247 = vpop.f32.mrf.mxu0
        %v1248 = vpop.f32.mrf.mxu0
        %v1249 = vadd.f32 %v1041, %v1248
        %v1250 = vpop.f32.mrf.mxu0
        %1251 = vdwg.mxu0
        %v1252 = vmax.f32 %v1126, 0.0
        %v1253 = vmax.f32 %v1129, 0.0
        %v1254 = vmax.f32 %v1134, 0.0
        %v1255 = vmax.f32 %v1137, 0.0
        %v1256 = vmax.f32 %v1142, 0.0
        %v1257 = vmax.f32 %v1145, 0.0
        %v1258 = vmax.f32 %v1150, 0.0
        %v1259 = vmax.f32 %v1153, 0.0
        %v1260 = vmax.f32 %v1158, 0.0
        %v1261 = vmax.f32 %v1161, 0.0
        %v1262 = vmax.f32 %v1166, 0.0
        %v1263 = vmax.f32 %v1169, 0.0
        %v1264 = vmax.f32 %v1174, 0.0
        %v1265 = vmax.f32 %v1177, 0.0
        %v1266 = vmax.f32 %v1182, 0.0
        %v1267 = vmax.f32 %v1185, 0.0
        %v1268 = vmax.f32 %v1190, 0.0
        %v1269 = vmax.f32 %v1193, 0.0
        %v1270 = vmax.f32 %v1198, 0.0
        %v1271 = vmax.f32 %v1201, 0.0
        %v1272 = vmax.f32 %v1206, 0.0
        %v1273 = vmax.f32 %v1209, 0.0
        %v1274 = vmax.f32 %v1214, 0.0
        %v1275 = vmax.f32 %v1217, 0.0
        %v1276 = vmax.f32 %v1222, 0.0
        %v1277 = vmax.f32 %v1225, 0.0
        %v1278 = vmax.f32 %v1230, 0.0
        %v1279 = vmax.f32 %v1233, 0.0
        %v1280 = vmax.f32 %v1238, 0.0
        %v1281 = vmax.f32 %v1241, 0.0
        %v1282 = vmax.f32 %v1246, 0.0
        %v1283 = vmax.f32 %v1249, 0.0
        %v1284 = vpack.c.bf16 %v1253, %v1252
        %v1285 = vpack.c.bf16 %v1255, %v1254
        %v1286 = vpack.c.bf16 %v1257, %v1256
        %v1287 = vpack.c.bf16 %v1259, %v1258
        %v1288 = vpack.c.bf16 %v1261, %v1260
        %v1289 = vpack.c.bf16 %v1263, %v1262
        %v1290 = vpack.c.bf16 %v1265, %v1264
        %v1291 = vpack.c.bf16 %v1267, %v1266
        %v1292 = vpack.c.bf16 %v1269, %v1268
        %v1293 = vpack.c.bf16 %v1271, %v1270
        %v1294 = vpack.c.bf16 %v1273, %v1272
        %v1295 = vpack.c.bf16 %v1275, %v1274
        %v1296 = vpack.c.bf16 %v1277, %v1276
        %v1297 = vpack.c.bf16 %v1279, %v1278
        %v1298 = vpack.c.bf16 %v1281, %v1280
        %v1299 = vpack.c.bf16 %v1283, %v1282
        %v1300 = vld [vmem:[#allocation10] sm:$0xf]
        %v1301 = vld [vmem:[#allocation10 + $0x4] sm:$0xf]
        %v1302 = vld [vmem:[#allocation10 + $0x8] sm:$0xf]
        %v1303 = vld [vmem:[#allocation10 + $0xc] sm:$0xf]
        %v1304 = vld [vmem:[#allocation10 + $0x10] sm:$0xf]
        %v1305 = vld [vmem:[#allocation10 + $0x14] sm:$0xf]
        %v1306 = vld [vmem:[#allocation10 + $0x18] sm:$0xf]
        %v1307 = vld [vmem:[#allocation10 + $0x1c] sm:$0xf]
        %v1308 = vld [vmem:[#allocation10 + $0x20] sm:$0xf]
        %v1309 = vld [vmem:[#allocation10 + $0x24] sm:$0xf]
        %v1310 = vld [vmem:[#allocation10 + $0x28] sm:$0xf]
        %v1311 = vld [vmem:[#allocation10 + $0x2c] sm:$0xf]
        %v1312 = vld [vmem:[#allocation10 + $0x30] sm:$0xf]
        %v1313 = vld [vmem:[#allocation10 + $0x34] sm:$0xf]
        %v1314 = vld [vmem:[#allocation10 + $0x38] sm:$0xf]
        %v1315 = vld [vmem:[#allocation10 + $0x3c] sm:$0xf]
        %v1316 = vld [vmem:[%s8] sm:$0x1]
        %v1318 = vlaneseq
        %v1319 = vshrl.u32 %v1318, 7
        %v1320 = vsub.s32 0, %v1319
        %v1321 = vrot.slane %v1316, %v1320
        %v1339 = vunpack.c.l.b16 %v1300
        %v1340 = vunpack.c.l.b16 %v1301
        %v1341 = vunpack.c.l.b16 %v1302
        %v1342 = vunpack.c.l.b16 %v1303
        %v1343 = vunpack.c.l.b16 %v1304
        %v1344 = vunpack.c.l.b16 %v1305
        %v1345 = vunpack.c.l.b16 %v1306
        %v1346 = vunpack.c.l.b16 %v1307
        %v1347 = vunpack.c.l.b16 %v1308
        %v1348 = vunpack.c.l.b16 %v1309
        %v1349 = vunpack.c.l.b16 %v1310
        %v1350 = vunpack.c.l.b16 %v1311
        %v1351 = vunpack.c.l.b16 %v1312
        %v1352 = vunpack.c.l.b16 %v1313
        %v1353 = vunpack.c.l.b16 %v1314
        %v1354 = vunpack.c.l.b16 %v1315
        %v1355 = vpack.c.b16 %v1340, %v1339
        %v1356 = vpack.c.b16 %v1342, %v1341
        %v1357 = vpack.c.b16 %v1344, %v1343
        %v1358 = vpack.c.b16 %v1346, %v1345
        %v1359 = vpack.c.b16 %v1348, %v1347
        %v1360 = vpack.c.b16 %v1350, %v1349
        %v1361 = vpack.c.b16 %v1352, %v1351
        %v1362 = vpack.c.b16 %v1354, %v1353
        %1371 = vmatprep.subr.bf16.mxu0 0
        %1372 = vmatpush1.bf16.msra.mxu0 %v1362
        %1373 = vmatprep.subr.bf16.mxu0 0
        %1374 = vmatpush1.bf16.msra.mxu0 %v1361
        %1375 = vmatprep.subr.bf16.mxu0 0
        %1376 = vmatpush1.bf16.msra.mxu0 %v1360
        %1377 = vmatprep.subr.bf16.mxu0 0
        %1378 = vmatpush1.bf16.msra.mxu0 %v1359
        %1379 = vmatprep.subr.bf16.mxu0 0
        %1380 = vmatpush1.bf16.msra.mxu0 %v1358
        %1381 = vmatprep.subr.bf16.mxu0 0
        %1382 = vmatpush1.bf16.msra.mxu0 %v1357
        %1383 = vmatprep.subr.bf16.mxu0 0
        %1384 = vmatpush1.bf16.msra.mxu0 %v1356
        %1385 = vmatprep.subr.bf16.mxu0 0
        %1386 = vmatpush1.bf16.msra.mxu0 %v1355
        %1387 = vmatprep.subr.bf16.mxu0 0
        %1388 = vmatpush2.bf16.msra.mxu0 0
        %1389 = vmatprep.subr.bf16.mxu0 0
        %1390 = vmatpush2.bf16.msra.mxu0 0
        %1391 = vmatprep.subr.bf16.mxu0 0
        %1392 = vmatpush2.bf16.msra.mxu0 0
        %1393 = vmatprep.subr.bf16.mxu0 0
        %1394 = vmatpush2.bf16.msra.mxu0 0
        %1395 = vmatprep.subr.bf16.mxu0 0
        %1396 = vmatpush2.bf16.msra.mxu0 0
        %1397 = vmatprep.subr.bf16.mxu0 0
        %1398 = vmatpush2.bf16.msra.mxu0 0
        %1399 = vmatprep.subr.bf16.mxu0 0
        %1400 = vmatpush2.bf16.msra.mxu0 0
        %1401 = vmatprep.subr.bf16.mxu0 0
        %1402 = vmatpush2.bf16.msra.mxu0 0
        %1403 = vmatprep.mubr.bf16.mxu0 0
        %1404 = vmatmul.mubr.bf16.gmra.mxu0 %v1284
        %v1405 = vpop.f32.mrf.mxu0
        %v1406 = vadd.f32 %v1321, %v1405
        %v1407 = vpop.f32.mrf.mxu0
        %v1408 = vpop.f32.mrf.mxu0
        %v1409 = vadd.f32 %v1321, %v1408
        %v1410 = vpop.f32.mrf.mxu0
        %1411 = vmatprep.mubr.bf16.mxu0 0
        %1412 = vmatmul.mubr.bf16.gmra.mxu0 %v1285
        %v1413 = vpop.f32.mrf.mxu0
        %v1414 = vadd.f32 %v1321, %v1413
        %v1415 = vpop.f32.mrf.mxu0
        %v1416 = vpop.f32.mrf.mxu0
        %v1417 = vadd.f32 %v1321, %v1416
        %v1418 = vpop.f32.mrf.mxu0
        %1419 = vmatprep.mubr.bf16.mxu0 0
        %1420 = vmatmul.mubr.bf16.gmra.mxu0 %v1286
        %v1421 = vpop.f32.mrf.mxu0
        %v1422 = vadd.f32 %v1321, %v1421
        %v1423 = vpop.f32.mrf.mxu0
        %v1424 = vpop.f32.mrf.mxu0
        %v1425 = vadd.f32 %v1321, %v1424
        %v1426 = vpop.f32.mrf.mxu0
        %1427 = vmatprep.mubr.bf16.mxu0 0
        %1428 = vmatmul.mubr.bf16.gmra.mxu0 %v1287
        %v1429 = vpop.f32.mrf.mxu0
        %v1430 = vadd.f32 %v1321, %v1429
        %v1431 = vpop.f32.mrf.mxu0
        %v1432 = vpop.f32.mrf.mxu0
        %v1433 = vadd.f32 %v1321, %v1432
        %v1434 = vpop.f32.mrf.mxu0
        %1435 = vmatprep.mubr.bf16.mxu0 0
        %1436 = vmatmul.mubr.bf16.gmra.mxu0 %v1288
        %v1437 = vpop.f32.mrf.mxu0
        %v1438 = vadd.f32 %v1321, %v1437
        %v1439 = vpop.f32.mrf.mxu0
        %v1440 = vpop.f32.mrf.mxu0
        %v1441 = vadd.f32 %v1321, %v1440
        %v1442 = vpop.f32.mrf.mxu0
        %1443 = vmatprep.mubr.bf16.mxu0 0
        %1444 = vmatmul.mubr.bf16.gmra.mxu0 %v1289
        %v1445 = vpop.f32.mrf.mxu0
        %v1446 = vadd.f32 %v1321, %v1445
        %v1447 = vpop.f32.mrf.mxu0
        %v1448 = vpop.f32.mrf.mxu0
        %v1449 = vadd.f32 %v1321, %v1448
        %v1450 = vpop.f32.mrf.mxu0
        %1451 = vmatprep.mubr.bf16.mxu0 0
        %1452 = vmatmul.mubr.bf16.gmra.mxu0 %v1290
        %v1453 = vpop.f32.mrf.mxu0
        %v1454 = vadd.f32 %v1321, %v1453
        %v1455 = vpop.f32.mrf.mxu0
        %v1456 = vpop.f32.mrf.mxu0
        %v1457 = vadd.f32 %v1321, %v1456
        %v1458 = vpop.f32.mrf.mxu0
        %1459 = vmatprep.mubr.bf16.mxu0 0
        %1460 = vmatmul.mubr.bf16.gmra.mxu0 %v1291
        %v1461 = vpop.f32.mrf.mxu0
        %v1462 = vadd.f32 %v1321, %v1461
        %v1463 = vpop.f32.mrf.mxu0
        %v1464 = vpop.f32.mrf.mxu0
        %v1465 = vadd.f32 %v1321, %v1464
        %v1466 = vpop.f32.mrf.mxu0
        %1467 = vmatprep.mubr.bf16.mxu0 0
        %1468 = vmatmul.mubr.bf16.gmra.mxu0 %v1292
        %v1469 = vpop.f32.mrf.mxu0
        %v1470 = vadd.f32 %v1321, %v1469
        %v1471 = vpop.f32.mrf.mxu0
        %v1472 = vpop.f32.mrf.mxu0
        %v1473 = vadd.f32 %v1321, %v1472
        %v1474 = vpop.f32.mrf.mxu0
        %1475 = vmatprep.mubr.bf16.mxu0 0
        %1476 = vmatmul.mubr.bf16.gmra.mxu0 %v1293
        %v1477 = vpop.f32.mrf.mxu0
        %v1478 = vadd.f32 %v1321, %v1477
        %v1479 = vpop.f32.mrf.mxu0
        %v1480 = vpop.f32.mrf.mxu0
        %v1481 = vadd.f32 %v1321, %v1480
        %v1482 = vpop.f32.mrf.mxu0
        %1483 = vmatprep.mubr.bf16.mxu0 0
        %1484 = vmatmul.mubr.bf16.gmra.mxu0 %v1294
        %v1485 = vpop.f32.mrf.mxu0
        %v1486 = vadd.f32 %v1321, %v1485
        %v1487 = vpop.f32.mrf.mxu0
        %v1488 = vpop.f32.mrf.mxu0
        %v1489 = vadd.f32 %v1321, %v1488
        %v1490 = vpop.f32.mrf.mxu0
        %1491 = vmatprep.mubr.bf16.mxu0 0
        %1492 = vmatmul.mubr.bf16.gmra.mxu0 %v1295
        %v1493 = vpop.f32.mrf.mxu0
        %v1494 = vadd.f32 %v1321, %v1493
        %v1495 = vpop.f32.mrf.mxu0
        %v1496 = vpop.f32.mrf.mxu0
        %v1497 = vadd.f32 %v1321, %v1496
        %v1498 = vpop.f32.mrf.mxu0
        %1499 = vmatprep.mubr.bf16.mxu0 0
        %1500 = vmatmul.mubr.bf16.gmra.mxu0 %v1296
        %v1501 = vpop.f32.mrf.mxu0
        %v1502 = vadd.f32 %v1321, %v1501
        %v1503 = vpop.f32.mrf.mxu0
        %v1504 = vpop.f32.mrf.mxu0
        %v1505 = vadd.f32 %v1321, %v1504
        %v1506 = vpop.f32.mrf.mxu0
        %1507 = vmatprep.mubr.bf16.mxu0 0
        %1508 = vmatmul.mubr.bf16.gmra.mxu0 %v1297
        %v1509 = vpop.f32.mrf.mxu0
        %v1510 = vadd.f32 %v1321, %v1509
        %v1511 = vpop.f32.mrf.mxu0
        %v1512 = vpop.f32.mrf.mxu0
        %v1513 = vadd.f32 %v1321, %v1512
        %v1514 = vpop.f32.mrf.mxu0
        %1515 = vmatprep.mubr.bf16.mxu0 0
        %1516 = vmatmul.mubr.bf16.gmra.mxu0 %v1298
        %v1517 = vpop.f32.mrf.mxu0
        %v1518 = vadd.f32 %v1321, %v1517
        %v1519 = vpop.f32.mrf.mxu0
        %v1520 = vpop.f32.mrf.mxu0
        %v1521 = vadd.f32 %v1321, %v1520
        %v1522 = vpop.f32.mrf.mxu0
        %1523 = vmatprep.mubr.bf16.mxu0 0
        %1524 = vmatmul.mubr.bf16.gmra.mxu0 %v1299
        %v1525 = vpop.f32.mrf.mxu0
        %v1526 = vadd.f32 %v1321, %v1525
        %v1527 = vpop.f32.mrf.mxu0
        %v1528 = vpop.f32.mrf.mxu0
        %v1529 = vadd.f32 %v1321, %v1528
        %v1530 = vpop.f32.mrf.mxu0
        %1531 = vdwg.mxu0
        %1532 = vst [vmem:[%s408] sm:$0xff] %v1406
        %1533 = vst [vmem:[%s408 + $0x8] sm:$0xff] %v1409
        %1534 = vst [vmem:[%s408 + $0x10] sm:$0xff] %v1414
        %1535 = vst [vmem:[%s408 + $0x18] sm:$0xff] %v1417
        %1536 = vst [vmem:[%s408 + $0x20] sm:$0xff] %v1422
        %1537 = vst [vmem:[%s408 + $0x28] sm:$0xff] %v1425
        %1538 = vst [vmem:[%s408 + $0x30] sm:$0xff] %v1430
        %1539 = vst [vmem:[%s408 + $0x38] sm:$0xff] %v1433
        %1540 = vst [vmem:[%s408 + $0x40] sm:$0xff] %v1438
        %1541 = vst [vmem:[%s408 + $0x48] sm:$0xff] %v1441
        %1542 = vst [vmem:[%s408 + $0x50] sm:$0xff] %v1446
        %1543 = vst [vmem:[%s408 + $0x58] sm:$0xff] %v1449
        %1544 = vst [vmem:[%s408 + $0x60] sm:$0xff] %v1454
        %1545 = vst [vmem:[%s408 + $0x68] sm:$0xff] %v1457
        %1546 = vst [vmem:[%s408 + $0x70] sm:$0xff] %v1462
        %1547 = vst [vmem:[%s408 + $0x78] sm:$0xff] %v1465
        %1548 = vst [vmem:[%s408 + $0x80] sm:$0xff] %v1470
        %1549 = vst [vmem:[%s408 + $0x88] sm:$0xff] %v1473
        %1550 = vst [vmem:[%s408 + $0x90] sm:$0xff] %v1478
        %1551 = vst [vmem:[%s408 + $0x98] sm:$0xff] %v1481
        %1552 = vst [vmem:[%s408 + $0xa0] sm:$0xff] %v1486
        %1553 = vst [vmem:[%s408 + $0xa8] sm:$0xff] %v1489
        %1554 = vst [vmem:[%s408 + $0xb0] sm:$0xff] %v1494
        %1555 = vst [vmem:[%s408 + $0xb8] sm:$0xff] %v1497
        %1556 = vst [vmem:[%s408 + $0xc0] sm:$0xff] %v1502
        %1557 = vst [vmem:[%s408 + $0xc8] sm:$0xff] %v1505
        %1558 = vst [vmem:[%s408 + $0xd0] sm:$0xff] %v1510
        %1559 = vst [vmem:[%s408 + $0xd8] sm:$0xff] %v1513
        %1560 = vst [vmem:[%s408 + $0xe0] sm:$0xff] %v1518
        %1561 = vst [vmem:[%s408 + $0xe8] sm:$0xff] %v1521
        %1562 = vst [vmem:[%s408 + $0xf0] sm:$0xff] %v1526
        %1563 = vst [vmem:[%s408 + $0xf8] sm:$0xff] %v1529
        %s1564 = sand.u32 %s230, 1
        %s1565 = scalar_lea.sflag [#allocation4], %s1564
        %s1566 = sand.u32 %s230, 1
        %s1567 = smul.addr %s1566, 256
        %s1568 = scalar_lea.vmem [#allocation11], %s1567
        // Predicated region
        $region77: #{tpu_custom_call.1} parent=55 // pred_check
          %p1569 = pneg %p240
        $region78: #{tpu_custom_call.1} parent=55 // pred_check_branch
          %1571 = sbr.rel (%p1569) target = $region80
        $region79: #{tpu_custom_call.1} parent=55 // pred_region
          %s1572 = smul.u32 32, %s28
          %s1574 = ssub.s32 4096, 4096
          %1575 = vsyncadd %s1565, %s1574
          %s1576 = smul.addr %s1572, 128
          %s1577 = scalar_lea.hbm %s9, %s1576
          %s1578 = sshll.u32 %s1568, 4
          %s1579 = int_to_ptr.vmem [resolvable:$true] %s1578
          %1584 = dma.vmem_to_hbm [thread:$0]  %s1579, 4096, %s1577, %s1565, 128, 128, 8
        $region80: #{tpu_custom_call.1} parent=55 // pred_fallthru
          _
      $region56: #{tpu_custom_call.1} parent=5 // pred_fallthru
        _
      %p1585 = scmp.le.s32.totalorder 2, %s23
      // Predicated region
      $region81: #{tpu_custom_call.1} parent=5 // pred_check
        %p1586 = pneg %p1585
      $region82: #{tpu_custom_call.1} parent=5 // pred_check_branch
        %1588 = sbr.rel (%p1586) target = $region84
      $region83: #{tpu_custom_call.1} parent=5 // pred_region
        %s1589 = ssub.s32 %s23, 2
        // Predicated region
        $region85: #{tpu_custom_call.1} parent=83 // pred_check
          %p1590 = pneg %p246
        $region86: #{tpu_custom_call.1} parent=83 // pred_check_branch
          %1592 = sbr.rel (%p1590) target = $region88
        $region87: #{tpu_custom_call.1} parent=83 // pred_region
          %s1593 = sand.u32 %s231, 1
          %s1594 = scalar_lea.sflag [#allocation4], %s1593
          %s1595 = sand.u32 %s231, 1
          %s1596 = smul.addr %s1595, 256
          %s1597 = scalar_lea.vmem [#allocation11], %s1596
          %1598 = dma.done %s1594, 4096
        $region88: #{tpu_custom_call.1} parent=83 // pred_fallthru
          _
      $region84: #{tpu_custom_call.1} parent=5 // pred_fallthru
        _
    $region6: #{tpu_custom_call.1} parent=1 // loop_footer
      %s27 = sadd.s32 1, %s23
    $region7: #{tpu_custom_call.1} parent=1 // loop_footer_branch
      %22 = sbr.rel target = $region3
    $region8: #{tpu_custom_call.1} parent=1 // loop_exit
      _
    %1599 = vsyncpa [#allocation3], 1
    %s1600 = scalar_lea.sflag [#allocation3], 1
    %1601 = vsyncpa %s1600, 1
    %1602 = vsyncpa [#allocation6], 1
    %1603 = vsyncpa [#allocation9], 1
    %1604 = vsyncpa [#allocation4], 1
    %s1605 = scalar_lea.sflag [#allocation4], 1
    %1606 = vsyncpa %s1605, 1

</llo_original>
